<compile_context>
chip_gen: v5e
topology: v5e:2x2
jax: 0.10.0
libtpu: 0.0.40
codegen_flags: <defaults>
</compile_context>

<pallas_src>
import jax
import jax.numpy as jnp
from jax.experimental import pallas as pl
from jax.experimental.pallas import tpu as pltpu


def _cdiv(a, b):
    return (a + b - 1) // b


def _round_up(a, b):
    return _cdiv(a, b) * b


# ----------------------------- Pallas kernel ------------------------------ #

def _make_mlp_kernel(h1, vrows):
    """Build the fused-MLP kernel body.

    `vrows` maps a vector-parameter name to (row, width) inside the packed
    [n_rows, V] bias/gamma/beta slab (all static Python ints).
    """

    def kernel(x_ref, w1f_ref, w2_ref, w3_ref, w4_ref, w5_ref, w6_ref,
               vec_ref, o_ref):

        def vec(name):
            r, w = vrows[name]
            return vec_ref[r:r + 1, 0:w]      # [1, w] f32, broadcasts over rows

        def linear(h, w_ref, bias_name):
            # bf16 operands on the MXU, f32 accumulation.
            return jnp.dot(h.astype(jnp.bfloat16), w_ref[...],
                           preferred_element_type=jnp.float32) + vec(bias_name)

        def layer_norm(h, g_name, b_name, eps=1e-5):
            mu = jnp.mean(h, axis=-1, keepdims=True)
            var = jnp.mean((h - mu) * (h - mu), axis=-1, keepdims=True)
            hn = (h - mu) * jax.lax.rsqrt(var + eps)
            return hn * vec(g_name) + vec(b_name)

        def leaky_relu(h):
            return jnp.where(h >= 0, h, 0.01 * h)

        x = x_ref[...].astype(jnp.float32)

        # Fused (fc1 | residual1) matmul: both share the same LHS.
        s = linear(x, w1f_ref, "b1f")          # [tile, 2*h1]
        h = s[:, :h1]                          # fc1 pre-activation
        residual = s[:, h1:]                   # residual branch

        h = leaky_relu(layer_norm(h, "g1", "be1"))
        h = leaky_relu(layer_norm(linear(h, w2_ref, "b2"), "g2", "be2"))
        h = h + residual
        h = leaky_relu(layer_norm(linear(h, w3_ref, "b3"), "g3", "be3"))
        h = leaky_relu(layer_norm(linear(h, w4_ref, "b4"), "g4", "be4"))
        h = leaky_relu(layer_norm(linear(h, w5_ref, "b5"), "g5", "be5"))

        o_ref[...] = linear(h, w6_ref, "b6p").astype(o_ref.dtype)

    return kernel


# ------------------------------ host wrapper ------------------------------- #

def complex_color_net_forward(x, params, num_bins, *, tile_n=512):
    """x: [..., in_features] -> [-1, 3, num_bins] (eval-mode forward)."""
    in_features = x.shape[-1]
    x2d = x.reshape(-1, in_features).astype(jnp.float32)
    n = x2d.shape[0]

    h1 = params["w1"].shape[1]
    out_dim = 3 * num_bins
    out_pad = _round_up(out_dim, 128)          # lane-dense output width

    # Row tile: as large as requested (multiple of 8), but keep >= 2 grid
    # steps when possible so both v7x TensorCores get work.
    tile_n = max(8, min(_round_up(tile_n, 8), _round_up(_cdiv(n, 2), 8)))
    n_pad = _round_up(n, tile_n)
    if n_pad != n:
        x2d = jnp.pad(x2d, ((0, n_pad - n), (0, 0)))
    grid = n_pad // tile_n

    # ---- weights: bf16, pre-transposed [in, out]; fuse fc1 | residual1 ----
    w1f = jnp.concatenate([params["w1"], params["rw"]], axis=1).astype(jnp.bfloat16)
    w2 = params["w2"].astype(jnp.bfloat16)
    w3 = params["w3"].astype(jnp.bfloat16)
    w4 = params["w4"].astype(jnp.bfloat16)
    w5 = params["w5"].astype(jnp.bfloat16)
    w6p = jnp.pad(params["w6"].astype(jnp.bfloat16),
                  ((0, 0), (0, out_pad - out_dim)))
    weights = [w1f, w2, w3, w4, w5, w6p]

    # ---- pack bias / gamma / beta vectors into one [n_rows, V] f32 slab ----
    b6p = jnp.pad(params["b6"].astype(jnp.float32),
                  ((0, 0), (0, out_pad - out_dim)))
    rows = [
        ("b1f", jnp.concatenate([params["b1"], params["rb"]], axis=1)),
        ("g1", params["g1"]), ("be1", params["be1"]),
        ("b2", params["b2"]), ("g2", params["g2"]), ("be2", params["be2"]),
        ("b3", params["b3"]), ("g3", params["g3"]), ("be3", params["be3"]),
        ("b4", params["b4"]), ("g4", params["g4"]), ("be4", params["be4"]),
        ("b5", params["b5"]), ("g5", params["g5"]), ("be5", params["be5"]),
        ("b6p", b6p),
    ]
    V = _round_up(max(int(r.shape[-1]) for _, r in rows), 128)
    vrows = {name: (i, int(r.shape[-1])) for i, (name, r) in enumerate(rows)}
    vec_slab = jnp.concatenate(
        [jnp.pad(r.astype(jnp.float32), ((0, 0), (0, V - r.shape[-1])))
         for _, r in rows], axis=0)

    # ---- specs: x/out tiled over rows, parameters as single full blocks ----
    x_spec = pl.BlockSpec((tile_n, in_features), lambda i: (i, 0))
    const_specs = [pl.BlockSpec(w.shape, lambda i: (0, 0)) for w in weights]
    const_specs.append(pl.BlockSpec(vec_slab.shape, lambda i: (0, 0)))
    out_spec = pl.BlockSpec((tile_n, out_pad), lambda i: (i, 0))

    out2d = pl.pallas_call(
        _make_mlp_kernel(h1, vrows),
        out_shape=jax.ShapeDtypeStruct((n_pad, out_pad), jnp.float32),
        grid_spec=pltpu.PrefetchScalarGridSpec(
            num_scalar_prefetch=0,
            grid=(grid,),
            in_specs=[x_spec] + const_specs,
            out_specs=out_spec,
        ),
        compiler_params=pltpu.CompilerParams(
            dimension_semantics=("parallel",),
            vmem_limit_bytes=32 * 1024 * 1024,
        ),
    )(x2d, *weights, vec_slab)

    # Drop row padding and output lane padding, then reshape like the module.
    return out2d[:n, :out_dim].reshape(-1, 3, num_bins)


# ------------------------- parameter initialization ------------------------ #

def init_params(key, in_features, h1, h2, h3, num_bins):
    """PyTorch-style init: Linear W,b ~ U(-1/sqrt(fan_in), 1/sqrt(fan_in));
    LayerNorm gamma=1, beta=0. Weights stored as [in, out] (transposed)."""
    def linear_init(key, fan_in, fan_out):
        kw, kb = jax.random.split(key)
        bound = 1.0 / jnp.sqrt(fan_in)
        w = jax.random.uniform(kw, (fan_in, fan_out), jnp.float32, -bound, bound)
        b = jax.random.uniform(kb, (1, fan_out), jnp.float32, -bound, bound)
        return w, b

    keys = jax.random.split(key, 7)
    params = {}
    params["rw"], params["rb"] = linear_init(keys[0], in_features, h1)
    params["w1"], params["b1"] = linear_init(keys[1], in_features, h1)
    params["w2"], params["b2"] = linear_init(keys[2], h1, h1)
    params["w3"], params["b3"] = linear_init(keys[3], h1, h2)
    params["w4"], params["b4"] = linear_init(keys[4], h2, h2)
    params["w5"], params["b5"] = linear_init(keys[5], h2, h3)
    params["w6"], params["b6"] = linear_init(keys[6], h3, 3 * num_bins)
    for idx, dim in zip([1, 2, 3, 4, 5], [h1, h1, h2, h2, h3]):
        params[f"g{idx}"] = jnp.ones((1, dim), jnp.float32)
        params[f"be{idx}"] = jnp.zeros((1, dim), jnp.float32)
    return params


# ------------------------------ JAX reference ------------------------------ #

def reference_forward(x, params, num_bins):
    """Mirrors the kernel math (bf16 weights/activations at each dot, f32
    accumulation, f32 LayerNorm) so the comparison isolates kernel bugs."""
    xp = x.reshape(-1, x.shape[-1]).astype(jnp.float32)

    def lin(h, w, b):
        return jnp.dot(h.astype(jnp.bfloat16), w.astype(jnp.bfloat16),
                       preferred_element_type=jnp.float32) + b

    def ln(h, g, b, eps=1e-5):
        mu = jnp.mean(h, axis=-1, keepdims=True)
        var = jnp.mean((h - mu) * (h - mu), axis=-1, keepdims=True)
        return (h - mu) * jax.lax.rsqrt(var + eps) * g + b

    def lrelu(h):
        return jnp.where(h >= 0, h, 0.01 * h)

    residual = lin(xp, params["rw"], params["rb"])
    h = lrelu(ln(lin(xp, params["w1"], params["b1"]), params["g1"], params["be1"]))
    h = lrelu(ln(lin(h, params["w2"], params["b2"]), params["g2"], params["be2"]))
    h = h + residual
    h = lrelu(ln(lin(h, params["w3"], params["b3"]), params["g3"], params["be3"]))
    h = lrelu(ln(lin(h, params["w4"], params["b4"]), params["g4"], params["be4"]))
    h = lrelu(ln(lin(h, params["w5"], params["b5"]), params["g5"], params["be5"]))
    out = lin(h, params["w6"], params["b6"])
    return out.reshape(-1, 3, num_bins)


# ---------------------------------- main ----------------------------------- #

if __name__ == "__main__":
    in_features, h1, h2, h3, num_bins = 32, 64, 64, 32, 16

    key = jax.random.PRNGKey(0)
    kx, kp = jax.random.split(key)
    # [4, 50, 32] -> 200 flattened rows: exercises row padding (200 -> 208)
    # and a 2-step grid while staying small.
    x = jax.random.normal(kx, (4, 50, in_features), jnp.float32)
    params = init_params(kp, in_features, h1, h2, h3, num_bins)

    out = complex_color_net_forward(x, params, num_bins)
    out = jax.block_until_ready(out)

    ref = reference_forward(x, params, num_bins)
    assert out.shape == (200, 3, num_bins), out.shape
    assert jnp.allclose(out, ref, atol=2e-2, rtol=2e-2), "mismatch vs reference"

    print("KERNEL_OK")
</pallas_src>

<mosaic_0001>
module attributes {stable_mosaic.version = 11 : i64} {
  func.func @kernel(%arg0: i32, %arg1: memref<104x32xf32, #tpu.memory_space<vmem>>, %arg2: memref<32x128xbf16, #tpu.memory_space<vmem>>, %arg3: memref<64x64xbf16, #tpu.memory_space<vmem>>, %arg4: memref<64x64xbf16, #tpu.memory_space<vmem>>, %arg5: memref<64x64xbf16, #tpu.memory_space<vmem>>, %arg6: memref<64x32xbf16, #tpu.memory_space<vmem>>, %arg7: memref<32x128xbf16, #tpu.memory_space<vmem>>, %arg8: memref<16x128xf32, #tpu.memory_space<vmem>>, %arg9: memref<104x128xf32, #tpu.memory_space<vmem>>) attributes {dimension_semantics = [#tpu.dimension_semantics<parallel>], iteration_bounds = array<i64: 2>, scalar_prefetch = 0 : i64, scratch_operands = 0 : i64, tpu.core_type = #tpu.core_type<tc>, window_params = [{transform_indices = @transform_0, window_bounds = array<i64: 104, 32>}, {pipeline_mode = #tpu.pipeline_mode<synchronous>, transform_indices = @transform_1, window_bounds = array<i64: 32, 128>}, {pipeline_mode = #tpu.pipeline_mode<synchronous>, transform_indices = @transform_2, window_bounds = array<i64: 64, 64>}, {pipeline_mode = #tpu.pipeline_mode<synchronous>, transform_indices = @transform_3, window_bounds = array<i64: 64, 64>}, {pipeline_mode = #tpu.pipeline_mode<synchronous>, transform_indices = @transform_4, window_bounds = array<i64: 64, 64>}, {pipeline_mode = #tpu.pipeline_mode<synchronous>, transform_indices = @transform_5, window_bounds = array<i64: 64, 32>}, {pipeline_mode = #tpu.pipeline_mode<synchronous>, transform_indices = @transform_6, window_bounds = array<i64: 32, 128>}, {pipeline_mode = #tpu.pipeline_mode<synchronous>, transform_indices = @transform_7, window_bounds = array<i64: 16, 128>}, {transform_indices = @transform_8, window_bounds = array<i64: 104, 128>}]} {
    %c0 = arith.constant 0 : index
    %c0_0 = arith.constant 0 : index
    %0 = vector.load %arg1[%c0, %c0_0] : memref<104x32xf32, #tpu.memory_space<vmem>>, vector<104x32xf32>
    %1 = arith.truncf %0 : vector<104x32xf32> to vector<104x32xbf16>
    %c0_1 = arith.constant 0 : index
    %c0_2 = arith.constant 0 : index
    %2 = vector.load %arg2[%c0_1, %c0_2] : memref<32x128xbf16, #tpu.memory_space<vmem>>, vector<32x128xbf16>
    %cst = arith.constant dense<0.000000e+00> : vector<104x128xf32>
    %3 = tpu.matmul %1, %2, %cst {dimension_numbers = #tpu.dot_dimension_numbers<[1], [0], [0], [1], [0, 0, 1, 1], [], []>} : vector<104x32xbf16>, vector<32x128xbf16>, vector<104x128xf32> -> vector<104x128xf32>
    %c0_3 = arith.constant 0 : index
    %c0_4 = arith.constant 0 : index
    %4 = vector.load %arg8[%c0_3, %c0_4] : memref<16x128xf32, #tpu.memory_space<vmem>>, vector<1x128xf32>
    %5 = vector.broadcast %4 : vector<1x128xf32> to vector<104x128xf32>
    %6 = arith.addf %3, %5 : vector<104x128xf32>
    %7 = vector.extract_strided_slice %6 {offsets = [0, 0], sizes = [104, 64], strides = [1, 1]} : vector<104x128xf32> to vector<104x64xf32>
    %8 = vector.extract_strided_slice %6 {offsets = [0, 64], sizes = [104, 64], strides = [1, 1]} : vector<104x128xf32> to vector<104x64xf32>
    %cst_5 = arith.constant dense<0.000000e+00> : vector<104xf32>
    %9 = vector.multi_reduction <add>, %7, %cst_5 [1] : vector<104x64xf32> to vector<104xf32>
    %10 = vector.shape_cast %9 : vector<104xf32> to vector<104x1xf32>
    %cst_6 = arith.constant 6.400000e+01 : f32
    %11 = vector.broadcast %cst_6 : f32 to vector<104x1xf32>
    %12 = arith.divf %10, %11 : vector<104x1xf32>
    %13 = vector.broadcast %12 : vector<104x1xf32> to vector<104x64xf32>
    %14 = arith.subf %7, %13 : vector<104x64xf32>
    %15 = vector.broadcast %12 : vector<104x1xf32> to vector<104x64xf32>
    %16 = arith.subf %7, %15 : vector<104x64xf32>
    %17 = arith.mulf %14, %16 : vector<104x64xf32>
    %cst_7 = arith.constant dense<0.000000e+00> : vector<104xf32>
    %18 = vector.multi_reduction <add>, %17, %cst_7 [1] : vector<104x64xf32> to vector<104xf32>
    %19 = vector.shape_cast %18 : vector<104xf32> to vector<104x1xf32>
    %cst_8 = arith.constant 6.400000e+01 : f32
    %20 = vector.broadcast %cst_8 : f32 to vector<104x1xf32>
    %21 = arith.divf %19, %20 : vector<104x1xf32>
    %22 = vector.broadcast %12 : vector<104x1xf32> to vector<104x64xf32>
    %23 = arith.subf %7, %22 : vector<104x64xf32>
    %cst_9 = arith.constant 9.99999974E-6 : f32
    %24 = vector.broadcast %cst_9 : f32 to vector<104x1xf32>
    %25 = arith.addf %21, %24 : vector<104x1xf32>
    %26 = math.rsqrt %25 : vector<104x1xf32>
    %27 = vector.broadcast %26 : vector<104x1xf32> to vector<104x64xf32>
    %28 = arith.mulf %23, %27 : vector<104x64xf32>
    %c1 = arith.constant 1 : index
    %c0_10 = arith.constant 0 : index
    %29 = vector.load %arg8[%c1, %c0_10] : memref<16x128xf32, #tpu.memory_space<vmem>>, vector<1x64xf32>
    %30 = vector.broadcast %29 : vector<1x64xf32> to vector<104x64xf32>
    %31 = arith.mulf %28, %30 : vector<104x64xf32>
    %c2 = arith.constant 2 : index
    %c0_11 = arith.constant 0 : index
    %32 = vector.load %arg8[%c2, %c0_11] : memref<16x128xf32, #tpu.memory_space<vmem>>, vector<1x64xf32>
    %33 = vector.broadcast %32 : vector<1x64xf32> to vector<104x64xf32>
    %34 = arith.addf %31, %33 : vector<104x64xf32>
    %cst_12 = arith.constant 0.000000e+00 : f32
    %35 = vector.broadcast %cst_12 : f32 to vector<104x64xf32>
    %36 = arith.cmpf oge, %34, %35 : vector<104x64xf32>
    %cst_13 = arith.constant 0.00999999977 : f32
    %37 = vector.broadcast %cst_13 : f32 to vector<104x64xf32>
    %38 = arith.mulf %37, %34 : vector<104x64xf32>
    %39 = arith.select %36, %34, %38 : vector<104x64xi1>, vector<104x64xf32>
    %40 = arith.truncf %39 : vector<104x64xf32> to vector<104x64xbf16>
    %c0_14 = arith.constant 0 : index
    %c0_15 = arith.constant 0 : index
    %41 = vector.load %arg3[%c0_14, %c0_15] : memref<64x64xbf16, #tpu.memory_space<vmem>>, vector<64x64xbf16>
    %cst_16 = arith.constant dense<0.000000e+00> : vector<104x64xf32>
    %42 = tpu.matmul %40, %41, %cst_16 {dimension_numbers = #tpu.dot_dimension_numbers<[1], [0], [0], [1], [0, 0, 1, 1], [], []>} : vector<104x64xbf16>, vector<64x64xbf16>, vector<104x64xf32> -> vector<104x64xf32>
    %c3 = arith.constant 3 : index
    %c0_17 = arith.constant 0 : index
    %43 = vector.load %arg8[%c3, %c0_17] : memref<16x128xf32, #tpu.memory_space<vmem>>, vector<1x64xf32>
    %44 = vector.broadcast %43 : vector<1x64xf32> to vector<104x64xf32>
    %45 = arith.addf %42, %44 : vector<104x64xf32>
    %cst_18 = arith.constant dense<0.000000e+00> : vector<104xf32>
    %46 = vector.multi_reduction <add>, %45, %cst_18 [1] : vector<104x64xf32> to vector<104xf32>
    %47 = vector.shape_cast %46 : vector<104xf32> to vector<104x1xf32>
    %cst_19 = arith.constant 6.400000e+01 : f32
    %48 = vector.broadcast %cst_19 : f32 to vector<104x1xf32>
    %49 = arith.divf %47, %48 : vector<104x1xf32>
    %50 = vector.broadcast %49 : vector<104x1xf32> to vector<104x64xf32>
    %51 = arith.subf %45, %50 : vector<104x64xf32>
    %52 = vector.broadcast %49 : vector<104x1xf32> to vector<104x64xf32>
    %53 = arith.subf %45, %52 : vector<104x64xf32>
    %54 = arith.mulf %51, %53 : vector<104x64xf32>
    %cst_20 = arith.constant dense<0.000000e+00> : vector<104xf32>
    %55 = vector.multi_reduction <add>, %54, %cst_20 [1] : vector<104x64xf32> to vector<104xf32>
    %56 = vector.shape_cast %55 : vector<104xf32> to vector<104x1xf32>
    %cst_21 = arith.constant 6.400000e+01 : f32
    %57 = vector.broadcast %cst_21 : f32 to vector<104x1xf32>
    %58 = arith.divf %56, %57 : vector<104x1xf32>
    %59 = vector.broadcast %49 : vector<104x1xf32> to vector<104x64xf32>
    %60 = arith.subf %45, %59 : vector<104x64xf32>
    %cst_22 = arith.constant 9.99999974E-6 : f32
    %61 = vector.broadcast %cst_22 : f32 to vector<104x1xf32>
    %62 = arith.addf %58, %61 : vector<104x1xf32>
    %63 = math.rsqrt %62 : vector<104x1xf32>
    %64 = vector.broadcast %63 : vector<104x1xf32> to vector<104x64xf32>
    %65 = arith.mulf %60, %64 : vector<104x64xf32>
    %c4 = arith.constant 4 : index
    %c0_23 = arith.constant 0 : index
    %66 = vector.load %arg8[%c4, %c0_23] : memref<16x128xf32, #tpu.memory_space<vmem>>, vector<1x64xf32>
    %67 = vector.broadcast %66 : vector<1x64xf32> to vector<104x64xf32>
    %68 = arith.mulf %65, %67 : vector<104x64xf32>
    %c5 = arith.constant 5 : index
    %c0_24 = arith.constant 0 : index
    %69 = vector.load %arg8[%c5, %c0_24] : memref<16x128xf32, #tpu.memory_space<vmem>>, vector<1x64xf32>
    %70 = vector.broadcast %69 : vector<1x64xf32> to vector<104x64xf32>
    %71 = arith.addf %68, %70 : vector<104x64xf32>
    %cst_25 = arith.constant 0.000000e+00 : f32
    %72 = vector.broadcast %cst_25 : f32 to vector<104x64xf32>
    %73 = arith.cmpf oge, %71, %72 : vector<104x64xf32>
    %cst_26 = arith.constant 0.00999999977 : f32
    %74 = vector.broadcast %cst_26 : f32 to vector<104x64xf32>
    %75 = arith.mulf %74, %71 : vector<104x64xf32>
    %76 = arith.select %73, %71, %75 : vector<104x64xi1>, vector<104x64xf32>
    %77 = arith.addf %76, %8 : vector<104x64xf32>
    %78 = arith.truncf %77 : vector<104x64xf32> to vector<104x64xbf16>
    %c0_27 = arith.constant 0 : index
    %c0_28 = arith.constant 0 : index
    %79 = vector.load %arg4[%c0_27, %c0_28] : memref<64x64xbf16, #tpu.memory_space<vmem>>, vector<64x64xbf16>
    %cst_29 = arith.constant dense<0.000000e+00> : vector<104x64xf32>
    %80 = tpu.matmul %78, %79, %cst_29 {dimension_numbers = #tpu.dot_dimension_numbers<[1], [0], [0], [1], [0, 0, 1, 1], [], []>} : vector<104x64xbf16>, vector<64x64xbf16>, vector<104x64xf32> -> vector<104x64xf32>
    %c6 = arith.constant 6 : index
    %c0_30 = arith.constant 0 : index
    %81 = vector.load %arg8[%c6, %c0_30] : memref<16x128xf32, #tpu.memory_space<vmem>>, vector<1x64xf32>
    %82 = vector.broadcast %81 : vector<1x64xf32> to vector<104x64xf32>
    %83 = arith.addf %80, %82 : vector<104x64xf32>
    %cst_31 = arith.constant dense<0.000000e+00> : vector<104xf32>
    %84 = vector.multi_reduction <add>, %83, %cst_31 [1] : vector<104x64xf32> to vector<104xf32>
    %85 = vector.shape_cast %84 : vector<104xf32> to vector<104x1xf32>
    %cst_32 = arith.constant 6.400000e+01 : f32
    %86 = vector.broadcast %cst_32 : f32 to vector<104x1xf32>
    %87 = arith.divf %85, %86 : vector<104x1xf32>
    %88 = vector.broadcast %87 : vector<104x1xf32> to vector<104x64xf32>
    %89 = arith.subf %83, %88 : vector<104x64xf32>
    %90 = vector.broadcast %87 : vector<104x1xf32> to vector<104x64xf32>
    %91 = arith.subf %83, %90 : vector<104x64xf32>
    %92 = arith.mulf %89, %91 : vector<104x64xf32>
    %cst_33 = arith.constant dense<0.000000e+00> : vector<104xf32>
    %93 = vector.multi_reduction <add>, %92, %cst_33 [1] : vector<104x64xf32> to vector<104xf32>
    %94 = vector.shape_cast %93 : vector<104xf32> to vector<104x1xf32>
    %cst_34 = arith.constant 6.400000e+01 : f32
    %95 = vector.broadcast %cst_34 : f32 to vector<104x1xf32>
    %96 = arith.divf %94, %95 : vector<104x1xf32>
    %97 = vector.broadcast %87 : vector<104x1xf32> to vector<104x64xf32>
    %98 = arith.subf %83, %97 : vector<104x64xf32>
    %cst_35 = arith.constant 9.99999974E-6 : f32
    %99 = vector.broadcast %cst_35 : f32 to vector<104x1xf32>
    %100 = arith.addf %96, %99 : vector<104x1xf32>
    %101 = math.rsqrt %100 : vector<104x1xf32>
    %102 = vector.broadcast %101 : vector<104x1xf32> to vector<104x64xf32>
    %103 = arith.mulf %98, %102 : vector<104x64xf32>
    %c7 = arith.constant 7 : index
    %c0_36 = arith.constant 0 : index
    %104 = vector.load %arg8[%c7, %c0_36] : memref<16x128xf32, #tpu.memory_space<vmem>>, vector<1x64xf32>
    %105 = vector.broadcast %104 : vector<1x64xf32> to vector<104x64xf32>
    %106 = arith.mulf %103, %105 : vector<104x64xf32>
    %c8 = arith.constant 8 : index
    %c0_37 = arith.constant 0 : index
    %107 = vector.load %arg8[%c8, %c0_37] : memref<16x128xf32, #tpu.memory_space<vmem>>, vector<1x64xf32>
    %108 = vector.broadcast %107 : vector<1x64xf32> to vector<104x64xf32>
    %109 = arith.addf %106, %108 : vector<104x64xf32>
    %cst_38 = arith.constant 0.000000e+00 : f32
    %110 = vector.broadcast %cst_38 : f32 to vector<104x64xf32>
    %111 = arith.cmpf oge, %109, %110 : vector<104x64xf32>
    %cst_39 = arith.constant 0.00999999977 : f32
    %112 = vector.broadcast %cst_39 : f32 to vector<104x64xf32>
    %113 = arith.mulf %112, %109 : vector<104x64xf32>
    %114 = arith.select %111, %109, %113 : vector<104x64xi1>, vector<104x64xf32>
    %115 = arith.truncf %114 : vector<104x64xf32> to vector<104x64xbf16>
    %c0_40 = arith.constant 0 : index
    %c0_41 = arith.constant 0 : index
    %116 = vector.load %arg5[%c0_40, %c0_41] : memref<64x64xbf16, #tpu.memory_space<vmem>>, vector<64x64xbf16>
    %cst_42 = arith.constant dense<0.000000e+00> : vector<104x64xf32>
    %117 = tpu.matmul %115, %116, %cst_42 {dimension_numbers = #tpu.dot_dimension_numbers<[1], [0], [0], [1], [0, 0, 1, 1], [], []>} : vector<104x64xbf16>, vector<64x64xbf16>, vector<104x64xf32> -> vector<104x64xf32>
    %c9 = arith.constant 9 : index
    %c0_43 = arith.constant 0 : index
    %118 = vector.load %arg8[%c9, %c0_43] : memref<16x128xf32, #tpu.memory_space<vmem>>, vector<1x64xf32>
    %119 = vector.broadcast %118 : vector<1x64xf32> to vector<104x64xf32>
    %120 = arith.addf %117, %119 : vector<104x64xf32>
    %cst_44 = arith.constant dense<0.000000e+00> : vector<104xf32>
    %121 = vector.multi_reduction <add>, %120, %cst_44 [1] : vector<104x64xf32> to vector<104xf32>
    %122 = vector.shape_cast %121 : vector<104xf32> to vector<104x1xf32>
    %cst_45 = arith.constant 6.400000e+01 : f32
    %123 = vector.broadcast %cst_45 : f32 to vector<104x1xf32>
    %124 = arith.divf %122, %123 : vector<104x1xf32>
    %125 = vector.broadcast %124 : vector<104x1xf32> to vector<104x64xf32>
    %126 = arith.subf %120, %125 : vector<104x64xf32>
    %127 = vector.broadcast %124 : vector<104x1xf32> to vector<104x64xf32>
    %128 = arith.subf %120, %127 : vector<104x64xf32>
    %129 = arith.mulf %126, %128 : vector<104x64xf32>
    %cst_46 = arith.constant dense<0.000000e+00> : vector<104xf32>
    %130 = vector.multi_reduction <add>, %129, %cst_46 [1] : vector<104x64xf32> to vector<104xf32>
    %131 = vector.shape_cast %130 : vector<104xf32> to vector<104x1xf32>
    %cst_47 = arith.constant 6.400000e+01 : f32
    %132 = vector.broadcast %cst_47 : f32 to vector<104x1xf32>
    %133 = arith.divf %131, %132 : vector<104x1xf32>
    %134 = vector.broadcast %124 : vector<104x1xf32> to vector<104x64xf32>
    %135 = arith.subf %120, %134 : vector<104x64xf32>
    %cst_48 = arith.constant 9.99999974E-6 : f32
    %136 = vector.broadcast %cst_48 : f32 to vector<104x1xf32>
    %137 = arith.addf %133, %136 : vector<104x1xf32>
    %138 = math.rsqrt %137 : vector<104x1xf32>
    %139 = vector.broadcast %138 : vector<104x1xf32> to vector<104x64xf32>
    %140 = arith.mulf %135, %139 : vector<104x64xf32>
    %c10 = arith.constant 10 : index
    %c0_49 = arith.constant 0 : index
    %141 = vector.load %arg8[%c10, %c0_49] : memref<16x128xf32, #tpu.memory_space<vmem>>, vector<1x64xf32>
    %142 = vector.broadcast %141 : vector<1x64xf32> to vector<104x64xf32>
    %143 = arith.mulf %140, %142 : vector<104x64xf32>
    %c11 = arith.constant 11 : index
    %c0_50 = arith.constant 0 : index
    %144 = vector.load %arg8[%c11, %c0_50] : memref<16x128xf32, #tpu.memory_space<vmem>>, vector<1x64xf32>
    %145 = vector.broadcast %144 : vector<1x64xf32> to vector<104x64xf32>
    %146 = arith.addf %143, %145 : vector<104x64xf32>
    %cst_51 = arith.constant 0.000000e+00 : f32
    %147 = vector.broadcast %cst_51 : f32 to vector<104x64xf32>
    %148 = arith.cmpf oge, %146, %147 : vector<104x64xf32>
    %cst_52 = arith.constant 0.00999999977 : f32
    %149 = vector.broadcast %cst_52 : f32 to vector<104x64xf32>
    %150 = arith.mulf %149, %146 : vector<104x64xf32>
    %151 = arith.select %148, %146, %150 : vector<104x64xi1>, vector<104x64xf32>
    %152 = arith.truncf %151 : vector<104x64xf32> to vector<104x64xbf16>
    %c0_53 = arith.constant 0 : index
    %c0_54 = arith.constant 0 : index
    %153 = vector.load %arg6[%c0_53, %c0_54] : memref<64x32xbf16, #tpu.memory_space<vmem>>, vector<64x32xbf16>
    %cst_55 = arith.constant dense<0.000000e+00> : vector<104x32xf32>
    %154 = tpu.matmul %152, %153, %cst_55 {dimension_numbers = #tpu.dot_dimension_numbers<[1], [0], [0], [1], [0, 0, 1, 1], [], []>} : vector<104x64xbf16>, vector<64x32xbf16>, vector<104x32xf32> -> vector<104x32xf32>
    %c12 = arith.constant 12 : index
    %c0_56 = arith.constant 0 : index
    %155 = vector.load %arg8[%c12, %c0_56] : memref<16x128xf32, #tpu.memory_space<vmem>>, vector<1x32xf32>
    %156 = vector.broadcast %155 : vector<1x32xf32> to vector<104x32xf32>
    %157 = arith.addf %154, %156 : vector<104x32xf32>
    %cst_57 = arith.constant dense<0.000000e+00> : vector<104xf32>
    %158 = vector.multi_reduction <add>, %157, %cst_57 [1] : vector<104x32xf32> to vector<104xf32>
    %159 = vector.shape_cast %158 : vector<104xf32> to vector<104x1xf32>
    %cst_58 = arith.constant 3.200000e+01 : f32
    %160 = vector.broadcast %cst_58 : f32 to vector<104x1xf32>
    %161 = arith.divf %159, %160 : vector<104x1xf32>
    %162 = vector.broadcast %161 : vector<104x1xf32> to vector<104x32xf32>
    %163 = arith.subf %157, %162 : vector<104x32xf32>
    %164 = vector.broadcast %161 : vector<104x1xf32> to vector<104x32xf32>
    %165 = arith.subf %157, %164 : vector<104x32xf32>
    %166 = arith.mulf %163, %165 : vector<104x32xf32>
    %cst_59 = arith.constant dense<0.000000e+00> : vector<104xf32>
    %167 = vector.multi_reduction <add>, %166, %cst_59 [1] : vector<104x32xf32> to vector<104xf32>
    %168 = vector.shape_cast %167 : vector<104xf32> to vector<104x1xf32>
    %cst_60 = arith.constant 3.200000e+01 : f32
    %169 = vector.broadcast %cst_60 : f32 to vector<104x1xf32>
    %170 = arith.divf %168, %169 : vector<104x1xf32>
    %171 = vector.broadcast %161 : vector<104x1xf32> to vector<104x32xf32>
    %172 = arith.subf %157, %171 : vector<104x32xf32>
    %cst_61 = arith.constant 9.99999974E-6 : f32
    %173 = vector.broadcast %cst_61 : f32 to vector<104x1xf32>
    %174 = arith.addf %170, %173 : vector<104x1xf32>
    %175 = math.rsqrt %174 : vector<104x1xf32>
    %176 = vector.broadcast %175 : vector<104x1xf32> to vector<104x32xf32>
    %177 = arith.mulf %172, %176 : vector<104x32xf32>
    %c13 = arith.constant 13 : index
    %c0_62 = arith.constant 0 : index
    %178 = vector.load %arg8[%c13, %c0_62] : memref<16x128xf32, #tpu.memory_space<vmem>>, vector<1x32xf32>
    %179 = vector.broadcast %178 : vector<1x32xf32> to vector<104x32xf32>
    %180 = arith.mulf %177, %179 : vector<104x32xf32>
    %c14 = arith.constant 14 : index
    %c0_63 = arith.constant 0 : index
    %181 = vector.load %arg8[%c14, %c0_63] : memref<16x128xf32, #tpu.memory_space<vmem>>, vector<1x32xf32>
    %182 = vector.broadcast %181 : vector<1x32xf32> to vector<104x32xf32>
    %183 = arith.addf %180, %182 : vector<104x32xf32>
    %cst_64 = arith.constant 0.000000e+00 : f32
    %184 = vector.broadcast %cst_64 : f32 to vector<104x32xf32>
    %185 = arith.cmpf oge, %183, %184 : vector<104x32xf32>
    %cst_65 = arith.constant 0.00999999977 : f32
    %186 = vector.broadcast %cst_65 : f32 to vector<104x32xf32>
    %187 = arith.mulf %186, %183 : vector<104x32xf32>
    %188 = arith.select %185, %183, %187 : vector<104x32xi1>, vector<104x32xf32>
    %189 = arith.truncf %188 : vector<104x32xf32> to vector<104x32xbf16>
    %c0_66 = arith.constant 0 : index
    %c0_67 = arith.constant 0 : index
    %190 = vector.load %arg7[%c0_66, %c0_67] : memref<32x128xbf16, #tpu.memory_space<vmem>>, vector<32x128xbf16>
    %cst_68 = arith.constant dense<0.000000e+00> : vector<104x128xf32>
    %191 = tpu.matmul %189, %190, %cst_68 {dimension_numbers = #tpu.dot_dimension_numbers<[1], [0], [0], [1], [0, 0, 1, 1], [], []>} : vector<104x32xbf16>, vector<32x128xbf16>, vector<104x128xf32> -> vector<104x128xf32>
    %c15 = arith.constant 15 : index
    %c0_69 = arith.constant 0 : index
    %192 = vector.load %arg8[%c15, %c0_69] : memref<16x128xf32, #tpu.memory_space<vmem>>, vector<1x128xf32>
    %193 = vector.broadcast %192 : vector<1x128xf32> to vector<104x128xf32>
    %194 = arith.addf %191, %193 : vector<104x128xf32>
    %c0_70 = arith.constant 0 : index
    %c0_71 = arith.constant 0 : index
    %195 = vector.load %arg9[%c0_70, %c0_71] : memref<104x128xf32, #tpu.memory_space<vmem>>, vector<104x128xf32>
    tpu.vector_store %arg9[%c0_70, %c0_71], %194 {strides = array<i32>} : memref<104x128xf32, #tpu.memory_space<vmem>>, vector<104x128xf32>,
    return
  }
  func.func @transform_0(%arg0: i32) -> (i32, i32) {
    %c0_i32 = arith.constant 0 : i32
    %c0_i32_0 = arith.constant 0 : i32
    return %arg0, %c0_i32 : i32, i32
  }
  func.func @transform_1(%arg0: i32) -> (i32, i32) {
    %c0_i32 = arith.constant 0 : i32
    %c0_i32_0 = arith.constant 0 : i32
    %c0_i32_1 = arith.constant 0 : i32
    return %c0_i32, %c0_i32_0 : i32, i32
  }
  func.func @transform_2(%arg0: i32) -> (i32, i32) {
    %c0_i32 = arith.constant 0 : i32
    %c0_i32_0 = arith.constant 0 : i32
    %c0_i32_1 = arith.constant 0 : i32
    return %c0_i32, %c0_i32_0 : i32, i32
  }
  func.func @transform_3(%arg0: i32) -> (i32, i32) {
    %c0_i32 = arith.constant 0 : i32
    %c0_i32_0 = arith.constant 0 : i32
    %c0_i32_1 = arith.constant 0 : i32
    return %c0_i32, %c0_i32_0 : i32, i32
  }
  func.func @transform_4(%arg0: i32) -> (i32, i32) {
    %c0_i32 = arith.constant 0 : i32
    %c0_i32_0 = arith.constant 0 : i32
    %c0_i32_1 = arith.constant 0 : i32
    return %c0_i32, %c0_i32_0 : i32, i32
  }
  func.func @transform_5(%arg0: i32) -> (i32, i32) {
    %c0_i32 = arith.constant 0 : i32
    %c0_i32_0 = arith.constant 0 : i32
    %c0_i32_1 = arith.constant 0 : i32
    return %c0_i32, %c0_i32_0 : i32, i32
  }
  func.func @transform_6(%arg0: i32) -> (i32, i32) {
    %c0_i32 = arith.constant 0 : i32
    %c0_i32_0 = arith.constant 0 : i32
    %c0_i32_1 = arith.constant 0 : i32
    return %c0_i32, %c0_i32_0 : i32, i32
  }
  func.func @transform_7(%arg0: i32) -> (i32, i32) {
    %c0_i32 = arith.constant 0 : i32
    %c0_i32_0 = arith.constant 0 : i32
    %c0_i32_1 = arith.constant 0 : i32
    return %c0_i32, %c0_i32_0 : i32, i32
  }
  func.func @transform_8(%arg0: i32) -> (i32, i32) {
    %c0_i32 = arith.constant 0 : i32
    %c0_i32_0 = arith.constant 0 : i32
    return %arg0, %c0_i32 : i32, i32
  }
}

</mosaic_0001>

<llo_original>
// kernel: tpu_custom_call.1
$region0: #{tpu_custom_call.1}
  #allocation0 [shape = 'u32[]', space=smem, size = 0x4, offset = 0x4, fixed_abs, tag = 'smem constant byte address 0x4 - core index']
  #allocation1 [shape = 'u32[72,128]{1,0:T(1,128)}', space=vmem, size = 0x9000, scoped, tag = 'internal scratch']
  %s0 = inlined_call_operand.vmem [shape: f32[208,32], index: 0, kind: input, shape index: {}]
  %s1 = inlined_call_operand.vmem [shape: bf16[32,128], index: 1, kind: input, shape index: {}]
  %s2 = inlined_call_operand.vmem [shape: bf16[64,64], index: 2, kind: input, shape index: {}]
  %s3 = inlined_call_operand.vmem [shape: bf16[64,64], index: 3, kind: input, shape index: {}]
  %s4 = inlined_call_operand.vmem [shape: bf16[64,64], index: 4, kind: input, shape index: {}]
  %s5 = inlined_call_operand.vmem [shape: bf16[64,32], index: 5, kind: input, shape index: {}]
  %s6 = inlined_call_operand.vmem [shape: bf16[32,128], index: 6, kind: input, shape index: {}]
  %s7 = inlined_call_operand.vmem [shape: f32[16,128], index: 7, kind: input, shape index: {}]
  %s8 = inlined_call_operand.hbm [shape: f32[208,128], index: 8, kind: output, shape index: {}]
  %s9 = sld [smem:[#allocation0]]
  $region65: #{tpu_custom_call.1} parent=0
    _
  %s11 = ssub.s32 1, %s9
  %s12 = scalar_select 0, %s11, %s9
  $region1: #{tpu_custom_call.1} parent=0
    #allocation2 [shape = 'u8[106496]{0}', space=vmem, size = 0x1a000, scoped, tag = 'output window, operand 0']
    #allocation3 [shape = 's32[2]{0}', space=sflag, size = 0x8, scoped, tag = 'scoped memory for tpu_custom_call.1']
    %13 = vsyncpa [#allocation3], 0
    %s14 = scalar_lea.sflag [#allocation3], 1
    %15 = vsyncpa %s14, 0
    loop: start=0, step=1, limit=4
    $region2: #{tpu_custom_call.1} parent=1 // loop_pre_header
      _
    $region3: #{tpu_custom_call.1} parent=1 // loop_header
      %s17 = sphi 0, %s21
      %p18 = scmp.ge.s32.totalorder %s17, 4
      %s27 = sphi 0, %s29
      %s30 = sphi 0, %s27
      %s31 = sphi 0, %s30
      %s47 = sphi 0, %s31
      %s51 = sphi 0, %s51
      %s53 = sphi 0, %s51
      %s54 = sphi 0, %s53
      %s68 = sphi 0, %s54
      %s72 = sphi 0, %s72
      %s74 = sphi 0, %s72
      %s75 = sphi 0, %s74
      %s89 = sphi 0, %s75
      %s93 = sphi 0, %s93
      %s95 = sphi 0, %s93
      %s96 = sphi 0, %s95
      %s110 = sphi 0, %s96
      %s114 = sphi 0, %s114
      %s116 = sphi 0, %s114
      %s117 = sphi 0, %s116
      %s131 = sphi 0, %s117
      %s135 = sphi 0, %s135
      %s137 = sphi 0, %s135
      %s138 = sphi 0, %s137
      %s152 = sphi 0, %s138
      %s156 = sphi 0, %s156
      %s158 = sphi 0, %s156
      %s159 = sphi 0, %s158
      %s173 = sphi 0, %s159
      %s177 = sphi 0, %s177
      %s179 = sphi 0, %s177
      %s180 = sphi 0, %s179
      %s194 = sphi 0, %s180
      %s200 = sphi 0, %s202
      %s203 = sphi 0, %s200
      %s204 = sphi 0, %s203
      %s220 = sphi 0, %s204
    $region4: #{tpu_custom_call.1} parent=1 // loop_header_branch
      %20 = sbr.rel (%p18) target = $region8
    $region5: #{tpu_custom_call.1} parent=1 // loop_body
      %s22 = ssub.s32 %s17, 1
      %s23 = ssub.s32 %s17, 2
      %s24 = sadd.s32 %s17, 1
      %s25 = ssub.s32 %s17, %s24
      %p26 = scmp.eq.s32.totalorder %s25, 0
      %s28 = sadd.s32 %s27, 1
      %s29 = scalar_select %p26, %s27, %s28
      %p32 = pneg %p26
      %p33 = scmp.eq.s32.totalorder %s17, 1
      %p34 = por %p32, %p33
      %p35 = scmp.ne.s32.totalorder %s27, %s30
      %p36 = scmp.eq.s32.totalorder %s17, 0
      %p37 = por %p35, %p36
      %p38 = scmp.ne.s32.totalorder %s27, %s30
      %p39 = scmp.eq.s32.totalorder %s22, 1
      %p40 = por %p38, %p39
      %p41 = scmp.ne.s32.totalorder %s30, %s31
      %p42 = scmp.eq.s32.totalorder %s22, 0
      %p43 = por %p41, %p42
      %p44 = scmp.ne.s32.totalorder %s30, %s31
      %p45 = scmp.eq.s32.totalorder %s23, 1
      %p46 = por %p44, %p45
      %p48 = scmp.ne.s32.totalorder %s31, %s47
      %p49 = scmp.eq.s32.totalorder %s23, 0
      %p50 = por %p48, %p49
      %s52 = sadd.s32 %s51, 1
      %p55 = scmp.eq.s32.totalorder %s17, 1
      %p56 = scmp.ne.s32.totalorder %s51, %s53
      %p57 = scmp.eq.s32.totalorder %s17, 0
      %p58 = por %p56, %p57
      %p59 = scmp.ne.s32.totalorder %s51, %s53
      %p60 = scmp.eq.s32.totalorder %s22, 1
      %p61 = por %p59, %p60
      %p62 = scmp.ne.s32.totalorder %s53, %s54
      %p63 = scmp.eq.s32.totalorder %s22, 0
      %p64 = por %p62, %p63
      %p65 = scmp.ne.s32.totalorder %s53, %s54
      %p66 = scmp.eq.s32.totalorder %s23, 1
      %p67 = por %p65, %p66
      %p69 = scmp.ne.s32.totalorder %s54, %s68
      %p70 = scmp.eq.s32.totalorder %s23, 0
      %p71 = por %p69, %p70
      %s73 = sadd.s32 %s72, 1
      %p76 = scmp.eq.s32.totalorder %s17, 1
      %p77 = scmp.ne.s32.totalorder %s72, %s74
      %p78 = scmp.eq.s32.totalorder %s17, 0
      %p79 = por %p77, %p78
      %p80 = scmp.ne.s32.totalorder %s72, %s74
      %p81 = scmp.eq.s32.totalorder %s22, 1
      %p82 = por %p80, %p81
      %p83 = scmp.ne.s32.totalorder %s74, %s75
      %p84 = scmp.eq.s32.totalorder %s22, 0
      %p85 = por %p83, %p84
      %p86 = scmp.ne.s32.totalorder %s74, %s75
      %p87 = scmp.eq.s32.totalorder %s23, 1
      %p88 = por %p86, %p87
      %p90 = scmp.ne.s32.totalorder %s75, %s89
      %p91 = scmp.eq.s32.totalorder %s23, 0
      %p92 = por %p90, %p91
      %s94 = sadd.s32 %s93, 1
      %p97 = scmp.eq.s32.totalorder %s17, 1
      %p98 = scmp.ne.s32.totalorder %s93, %s95
      %p99 = scmp.eq.s32.totalorder %s17, 0
      %p100 = por %p98, %p99
      %p101 = scmp.ne.s32.totalorder %s93, %s95
      %p102 = scmp.eq.s32.totalorder %s22, 1
      %p103 = por %p101, %p102
      %p104 = scmp.ne.s32.totalorder %s95, %s96
      %p105 = scmp.eq.s32.totalorder %s22, 0
      %p106 = por %p104, %p105
      %p107 = scmp.ne.s32.totalorder %s95, %s96
      %p108 = scmp.eq.s32.totalorder %s23, 1
      %p109 = por %p107, %p108
      %p111 = scmp.ne.s32.totalorder %s96, %s110
      %p112 = scmp.eq.s32.totalorder %s23, 0
      %p113 = por %p111, %p112
      %s115 = sadd.s32 %s114, 1
      %p118 = scmp.eq.s32.totalorder %s17, 1
      %p119 = scmp.ne.s32.totalorder %s114, %s116
      %p120 = scmp.eq.s32.totalorder %s17, 0
      %p121 = por %p119, %p120
      %p122 = scmp.ne.s32.totalorder %s114, %s116
      %p123 = scmp.eq.s32.totalorder %s22, 1
      %p124 = por %p122, %p123
      %p125 = scmp.ne.s32.totalorder %s116, %s117
      %p126 = scmp.eq.s32.totalorder %s22, 0
      %p127 = por %p125, %p126
      %p128 = scmp.ne.s32.totalorder %s116, %s117
      %p129 = scmp.eq.s32.totalorder %s23, 1
      %p130 = por %p128, %p129
      %p132 = scmp.ne.s32.totalorder %s117, %s131
      %p133 = scmp.eq.s32.totalorder %s23, 0
      %p134 = por %p132, %p133
      %s136 = sadd.s32 %s135, 1
      %p139 = scmp.eq.s32.totalorder %s17, 1
      %p140 = scmp.ne.s32.totalorder %s135, %s137
      %p141 = scmp.eq.s32.totalorder %s17, 0
      %p142 = por %p140, %p141
      %p143 = scmp.ne.s32.totalorder %s135, %s137
      %p144 = scmp.eq.s32.totalorder %s22, 1
      %p145 = por %p143, %p144
      %p146 = scmp.ne.s32.totalorder %s137, %s138
      %p147 = scmp.eq.s32.totalorder %s22, 0
      %p148 = por %p146, %p147
      %p149 = scmp.ne.s32.totalorder %s137, %s138
      %p150 = scmp.eq.s32.totalorder %s23, 1
      %p151 = por %p149, %p150
      %p153 = scmp.ne.s32.totalorder %s138, %s152
      %p154 = scmp.eq.s32.totalorder %s23, 0
      %p155 = por %p153, %p154
      %s157 = sadd.s32 %s156, 1
      %p160 = scmp.eq.s32.totalorder %s17, 1
      %p161 = scmp.ne.s32.totalorder %s156, %s158
      %p162 = scmp.eq.s32.totalorder %s17, 0
      %p163 = por %p161, %p162
      %p164 = scmp.ne.s32.totalorder %s156, %s158
      %p165 = scmp.eq.s32.totalorder %s22, 1
      %p166 = por %p164, %p165
      %p167 = scmp.ne.s32.totalorder %s158, %s159
      %p168 = scmp.eq.s32.totalorder %s22, 0
      %p169 = por %p167, %p168
      %p170 = scmp.ne.s32.totalorder %s158, %s159
      %p171 = scmp.eq.s32.totalorder %s23, 1
      %p172 = por %p170, %p171
      %p174 = scmp.ne.s32.totalorder %s159, %s173
      %p175 = scmp.eq.s32.totalorder %s23, 0
      %p176 = por %p174, %p175
      %s178 = sadd.s32 %s177, 1
      %p181 = scmp.eq.s32.totalorder %s17, 1
      %p182 = scmp.ne.s32.totalorder %s177, %s179
      %p183 = scmp.eq.s32.totalorder %s17, 0
      %p184 = por %p182, %p183
      %p185 = scmp.ne.s32.totalorder %s177, %s179
      %p186 = scmp.eq.s32.totalorder %s22, 1
      %p187 = por %p185, %p186
      %p188 = scmp.ne.s32.totalorder %s179, %s180
      %p189 = scmp.eq.s32.totalorder %s22, 0
      %p190 = por %p188, %p189
      %p191 = scmp.ne.s32.totalorder %s179, %s180
      %p192 = scmp.eq.s32.totalorder %s23, 1
      %p193 = por %p191, %p192
      %p195 = scmp.ne.s32.totalorder %s180, %s194
      %p196 = scmp.eq.s32.totalorder %s23, 0
      %p197 = por %p195, %p196
      %s198 = ssub.s32 %s17, %s24
      %p199 = scmp.eq.s32.totalorder %s198, 0
      %s201 = sadd.s32 %s200, 1
      %s202 = scalar_select %p199, %s200, %s201
      %p205 = pneg %p199
      %p206 = scmp.eq.s32.totalorder %s17, 1
      %p207 = por %p205, %p206
      %p208 = scmp.ne.s32.totalorder %s200, %s203
      %p209 = scmp.eq.s32.totalorder %s17, 0
      %p210 = por %p208, %p209
      %p211 = scmp.ne.s32.totalorder %s200, %s203
      %p212 = scmp.eq.s32.totalorder %s22, 1
      %p213 = por %p211, %p212
      %p214 = scmp.ne.s32.totalorder %s203, %s204
      %p215 = scmp.eq.s32.totalorder %s22, 0
      %p216 = por %p214, %p215
      %p217 = scmp.ne.s32.totalorder %s203, %s204
      %p218 = scmp.eq.s32.totalorder %s23, 1
      %p219 = por %p217, %p218
      %p221 = scmp.ne.s32.totalorder %s204, %s220
      %p222 = scmp.eq.s32.totalorder %s23, 0
      %p223 = por %p221, %p222
      %p224 = scmp.le.s32.totalorder 1, %s17
      %p225 = scmp.lt.s32.totalorder %s17, 3
      %p226 = pnand %p224, %p225
      %p227 = pneg %p226
      // Predicated region
      $region9: #{tpu_custom_call.1} parent=5 // pred_check
        _
      $region10: #{tpu_custom_call.1} parent=5 // pred_check_branch
        %229 = sbr.rel (%p226) target = $region12
      $region11: #{tpu_custom_call.1} parent=5 // pred_region
        %s230 = ssub.s32 %s17, 1
        // Predicated region
        $region13: #{tpu_custom_call.1} parent=11 // pred_check
          %p231 = pneg %p64
        $region14: #{tpu_custom_call.1} parent=11 // pred_check_branch
          %233 = sbr.rel (%p231) target = $region16
        $region15: #{tpu_custom_call.1} parent=11 // pred_region
          _
        $region16: #{tpu_custom_call.1} parent=11 // pred_fallthru
          _
        // Predicated region
        $region17: #{tpu_custom_call.1} parent=11 // pred_check
          %p234 = pneg %p85
        $region18: #{tpu_custom_call.1} parent=11 // pred_check_branch
          %236 = sbr.rel (%p234) target = $region20
        $region19: #{tpu_custom_call.1} parent=11 // pred_region
          _
        $region20: #{tpu_custom_call.1} parent=11 // pred_fallthru
          _
        // Predicated region
        $region21: #{tpu_custom_call.1} parent=11 // pred_check
          %p237 = pneg %p106
        $region22: #{tpu_custom_call.1} parent=11 // pred_check_branch
          %239 = sbr.rel (%p237) target = $region24
        $region23: #{tpu_custom_call.1} parent=11 // pred_region
          _
        $region24: #{tpu_custom_call.1} parent=11 // pred_fallthru
          _
        // Predicated region
        $region25: #{tpu_custom_call.1} parent=11 // pred_check
          %p240 = pneg %p127
        $region26: #{tpu_custom_call.1} parent=11 // pred_check_branch
          %242 = sbr.rel (%p240) target = $region28
        $region27: #{tpu_custom_call.1} parent=11 // pred_region
          _
        $region28: #{tpu_custom_call.1} parent=11 // pred_fallthru
          _
        // Predicated region
        $region29: #{tpu_custom_call.1} parent=11 // pred_check
          %p243 = pneg %p148
        $region30: #{tpu_custom_call.1} parent=11 // pred_check_branch
          %245 = sbr.rel (%p243) target = $region32
        $region31: #{tpu_custom_call.1} parent=11 // pred_region
          _
        $region32: #{tpu_custom_call.1} parent=11 // pred_fallthru
          _
        // Predicated region
        $region33: #{tpu_custom_call.1} parent=11 // pred_check
          %p246 = pneg %p169
        $region34: #{tpu_custom_call.1} parent=11 // pred_check_branch
          %248 = sbr.rel (%p246) target = $region36
        $region35: #{tpu_custom_call.1} parent=11 // pred_region
          _
        $region36: #{tpu_custom_call.1} parent=11 // pred_fallthru
          _
        // Predicated region
        $region37: #{tpu_custom_call.1} parent=11 // pred_check
          %p249 = pneg %p190
        $region38: #{tpu_custom_call.1} parent=11 // pred_check_branch
          %251 = sbr.rel (%p249) target = $region40
        $region39: #{tpu_custom_call.1} parent=11 // pred_region
          _
        $region40: #{tpu_custom_call.1} parent=11 // pred_fallthru
          _
      $region12: #{tpu_custom_call.1} parent=5 // pred_fallthru
        _
      %p252 = scmp.lt.s32.totalorder %s17, 2
      // Predicated region
      $region41: #{tpu_custom_call.1} parent=5 // pred_check
        %p253 = pneg %p252
      $region42: #{tpu_custom_call.1} parent=5 // pred_check_branch
        %255 = sbr.rel (%p253) target = $region44
      $region43: #{tpu_custom_call.1} parent=5 // pred_region
        // Predicated region
        $region45: #{tpu_custom_call.1} parent=43 // pred_check
          %p256 = pneg %p37
        $region46: #{tpu_custom_call.1} parent=43 // pred_check_branch
          %258 = sbr.rel (%p256) target = $region48
        $region47: #{tpu_custom_call.1} parent=43 // pred_region
          %s259 = smul.u32 13, %s17
          %p260 = scmp.lt.s32.totalorder %s259, 25
          %s261 = scalar_select %p260, %s259, 25
          %s262 = smul.addr %s261, 8
          %s263 = scalar_lea.vmem %s0, %s262
          %s264 = smul.u32 13, %s17
        $region48: #{tpu_custom_call.1} parent=43 // pred_fallthru
          _
      $region44: #{tpu_custom_call.1} parent=5 // pred_fallthru
        _
      %p265 = scmp.le.s32.totalorder 1, %s17
      %p266 = scmp.lt.s32.totalorder %s17, 3
      %p267 = pnand %p265, %p266
      %p268 = pneg %p267
      // Predicated region
      $region49: #{tpu_custom_call.1} parent=5 // pred_check
        _
      $region50: #{tpu_custom_call.1} parent=5 // pred_check_branch
        %270 = sbr.rel (%p267) target = $region52
      $region51: #{tpu_custom_call.1} parent=5 // pred_region
        %s271 = ssub.s32 %s17, 1
        %s272 = smul.u32 13, %s22
        %p273 = scmp.lt.s32.totalorder %s272, 25
        %s274 = scalar_select %p273, %s272, 25
        %s275 = smul.addr %s274, 8
        %s276 = scalar_lea.vmem %s0, %s275
        %p277 = pneg %p43
        %p278 = pneg %p40
        %p279 = pneg %p64
        %p280 = pneg %p61
        %p281 = pneg %p85
        %p282 = pneg %p82
        %p283 = pneg %p106
        %p284 = pneg %p103
        %p285 = pneg %p127
        %p286 = pneg %p124
        %p287 = pneg %p148
        %p288 = pneg %p145
        %p289 = pneg %p169
        %p290 = pneg %p166
        %p291 = pneg %p190
        %p292 = pneg %p187
        %p293 = pneg %p216
        %p294 = pneg %p213
        %s295 = sand.u32 %s203, 1
        %s296 = scalar_lea.sflag [#allocation3], %s295
        %s297 = sand.u32 %s203, 1
        %s298 = smul.addr %s297, 104
        %s299 = scalar_lea.vmem [#allocation2], %s298
        %s300 = smul.u32 13, %s22
        %p301 = scmp.lt.s32.totalorder %s300, 25
        %s302 = scalar_select %p301, %s300, 25
        %s303 = smul.addr %s302, 8
        %s304 = scalar_lea.vmem %s0, %s303
        %s305 = smul.u32 13, %s22
        %s306 = smul.u32 13, %s22
        %v308 = vld [vmem:[%s304] sm:$0xff]
        %v309 = vld [vmem:[%s304 + $0x8] sm:$0xff]
        %v310 = vld [vmem:[%s304 + $0x10] sm:$0xff]
        %v311 = vld [vmem:[%s304 + $0x18] sm:$0xff]
        %v312 = vld [vmem:[%s304 + $0x20] sm:$0xff]
        %v313 = vld [vmem:[%s304 + $0x28] sm:$0xff]
        %v314 = vld [vmem:[%s304 + $0x30] sm:$0xff]
        %v315 = vld [vmem:[%s304 + $0x38] sm:$0xff]
        %v316 = vld [vmem:[%s304 + $0x40] sm:$0xff]
        %v317 = vld [vmem:[%s304 + $0x48] sm:$0xff]
        %v318 = vld [vmem:[%s304 + $0x50] sm:$0xff]
        %v319 = vld [vmem:[%s304 + $0x58] sm:$0xff]
        %v320 = vld [vmem:[%s304 + $0x60] sm:$0xff]
        %v321 = vpack.c.bf16 %v309, %v308
        %v322 = vpack.c.bf16 %v311, %v310
        %v323 = vpack.c.bf16 %v313, %v312
        %v324 = vpack.c.bf16 %v315, %v314
        %v325 = vpack.c.bf16 %v317, %v316
        %v326 = vpack.c.bf16 %v319, %v318
        %v327 = vpack.c.bf16 %v320, %v320
        %v328 = vld [vmem:[%s1] sm:$0xf]
        %v329 = vld [vmem:[%s1 + $0x4] sm:$0xf]
        %v330 = vld [vmem:[%s1 + $0x8] sm:$0xf]
        %v331 = vld [vmem:[%s1 + $0xc] sm:$0xf]
        %v332 = vld [vmem:[%s7] sm:$0x1]
        %v333 = vperm.slane %v332, 0
        %v338 = vunpack.c.l.b16 %v328
        %v339 = vunpack.c.l.b16 %v329
        %v340 = vunpack.c.l.b16 %v330
        %v341 = vunpack.c.l.b16 %v331
        %v342 = vpack.c.b16 %v339, %v338
        %v343 = vpack.c.b16 %v341, %v340
        %vm346 = vcmask 261120
        %v348 = vsel %vm346, %v321, 0
        %v351 = vsel %vm346, %v322, 0
        %v354 = vsel %vm346, %v323, 0
        %v357 = vsel %vm346, %v324, 0
        %v360 = vsel %vm346, %v325, 0
        %v363 = vsel %vm346, %v326, 0
        %v366 = vsel %vm346, %v327, 0
        %368 = vmatpush.bf16.msra.mxu0 0
        %369 = vmatpush.bf16.msra.mxu0 0
        %370 = vmatpush.bf16.msra.mxu0 0
        %371 = vmatpush.bf16.msra.mxu0 0
        %372 = vmatpush.bf16.msra.mxu0 0
        %373 = vmatpush.bf16.msra.mxu0 0
        %374 = vmatpush.bf16.msra.mxu0 %v343
        %375 = vmatpush.bf16.msra.mxu0 %v342
        %376 = vmatmul.bf16.gmra.mxu0 %v348
        %v377 = vpop.f32.mrf.mxu0
        %v378 = vadd.f32 %v333, %v377
        %v379 = vpop.f32.mrf.mxu0
        %v380 = vadd.f32 %v333, %v379
        %381 = vmatmul.bf16.gmra.mxu0 %v351
        %v382 = vpop.f32.mrf.mxu0
        %v383 = vadd.f32 %v333, %v382
        %v384 = vpop.f32.mrf.mxu0
        %v385 = vadd.f32 %v333, %v384
        %386 = vmatmul.bf16.gmra.mxu0 %v354
        %v387 = vpop.f32.mrf.mxu0
        %v388 = vadd.f32 %v333, %v387
        %v389 = vpop.f32.mrf.mxu0
        %v390 = vadd.f32 %v333, %v389
        %391 = vmatmul.bf16.gmra.mxu0 %v357
        %v392 = vpop.f32.mrf.mxu0
        %v393 = vadd.f32 %v333, %v392
        %v394 = vpop.f32.mrf.mxu0
        %v395 = vadd.f32 %v333, %v394
        %396 = vmatmul.bf16.gmra.mxu0 %v360
        %v397 = vpop.f32.mrf.mxu0
        %v398 = vadd.f32 %v333, %v397
        %v399 = vpop.f32.mrf.mxu0
        %v400 = vadd.f32 %v333, %v399
        %401 = vmatmul.bf16.gmra.mxu0 %v363
        %v402 = vpop.f32.mrf.mxu0
        %v403 = vadd.f32 %v333, %v402
        %v404 = vpop.f32.mrf.mxu0
        %v405 = vadd.f32 %v333, %v404
        %406 = vmatmul.bf16.gmra.mxu0 %v366
        %v407 = vpop.f32.mrf.mxu0
        %v408 = vadd.f32 %v333, %v407
        %v409 = vpop.f32.mrf.mxu0
        %410 = vdwg.mxu0
        %vm411 = vcmask 523264
        %v412 = vsel %vm411, %v378, 0.0
        %413 = vadd.xlane.f32.xlu0 %v412
        %v414 = vpop.xlane.xlu0 %413
        %v415 = vsel %vm411, %v380, 0.0
        %416 = vadd.xlane.f32.xlu0 %v415
        %v417 = vpop.xlane.xlu0 %416
        %v418 = vsel %vm411, %v383, 0.0
        %419 = vadd.xlane.f32.xlu0 %v418
        %v420 = vpop.xlane.xlu0 %419
        %v421 = vsel %vm411, %v385, 0.0
        %422 = vadd.xlane.f32.xlu0 %v421
        %v423 = vpop.xlane.xlu0 %422
        %v424 = vsel %vm411, %v388, 0.0
        %425 = vadd.xlane.f32.xlu0 %v424
        %v426 = vpop.xlane.xlu0 %425
        %v427 = vsel %vm411, %v390, 0.0
        %428 = vadd.xlane.f32.xlu0 %v427
        %v429 = vpop.xlane.xlu0 %428
        %v430 = vsel %vm411, %v393, 0.0
        %431 = vadd.xlane.f32.xlu0 %v430
        %v432 = vpop.xlane.xlu0 %431
        %v433 = vsel %vm411, %v395, 0.0
        %434 = vadd.xlane.f32.xlu0 %v433
        %v435 = vpop.xlane.xlu0 %434
        %v436 = vsel %vm411, %v398, 0.0
        %437 = vadd.xlane.f32.xlu0 %v436
        %v438 = vpop.xlane.xlu0 %437
        %v439 = vsel %vm411, %v400, 0.0
        %440 = vadd.xlane.f32.xlu0 %v439
        %v441 = vpop.xlane.xlu0 %440
        %v442 = vsel %vm411, %v403, 0.0
        %443 = vadd.xlane.f32.xlu0 %v442
        %v444 = vpop.xlane.xlu0 %443
        %v445 = vsel %vm411, %v405, 0.0
        %446 = vadd.xlane.f32.xlu0 %v445
        %v447 = vpop.xlane.xlu0 %446
        %v448 = vsel %vm411, %v408, 0.0
        %449 = vadd.xlane.f32.xlu0 %v448
        %v450 = vpop.xlane.xlu0 %449
        %v451 = vrcp.pop 64.0
        %v452 = vmul.f32 64.0, %v451
        %v453 = vsub.f32 1.0, %v452
        %v454 = vmul.f32 %v451, %v453
        %v455 = vadd.f32 %v451, %v454
        %vm456 = vweird.f32 %v451
        %v457 = vsel %vm456, %v451, %v455
        %v458 = vmul.f32 %v414, %v457
        %v459 = vmul.f32 %v417, %v457
        %v460 = vmul.f32 %v420, %v457
        %v461 = vmul.f32 %v423, %v457
        %v462 = vmul.f32 %v426, %v457
        %v463 = vmul.f32 %v429, %v457
        %v464 = vmul.f32 %v432, %v457
        %v465 = vmul.f32 %v435, %v457
        %v466 = vmul.f32 %v438, %v457
        %v467 = vmul.f32 %v441, %v457
        %v468 = vmul.f32 %v444, %v457
        %v469 = vmul.f32 %v447, %v457
        %v470 = vmul.f32 %v450, %v457
        %v471 = vsub.f32 %v378, %v458
        %v472 = vsub.f32 %v380, %v459
        %v473 = vsub.f32 %v383, %v460
        %v474 = vsub.f32 %v385, %v461
        %v475 = vsub.f32 %v388, %v462
        %v476 = vsub.f32 %v390, %v463
        %v477 = vsub.f32 %v393, %v464
        %v478 = vsub.f32 %v395, %v465
        %v479 = vsub.f32 %v398, %v466
        %v480 = vsub.f32 %v400, %v467
        %v481 = vsub.f32 %v403, %v468
        %v482 = vsub.f32 %v405, %v469
        %v483 = vsub.f32 %v408, %v470
        %v484 = vmul.f32 %v471, %v471
        %v485 = vmul.f32 %v472, %v472
        %v486 = vmul.f32 %v473, %v473
        %v487 = vmul.f32 %v474, %v474
        %v488 = vmul.f32 %v475, %v475
        %v489 = vmul.f32 %v476, %v476
        %v490 = vmul.f32 %v477, %v477
        %v491 = vmul.f32 %v478, %v478
        %v492 = vmul.f32 %v479, %v479
        %v493 = vmul.f32 %v480, %v480
        %v494 = vmul.f32 %v481, %v481
        %v495 = vmul.f32 %v482, %v482
        %v496 = vmul.f32 %v483, %v483
        %v497 = vsel %vm411, %v484, 0.0
        %498 = vadd.xlane.f32.xlu0 %v497
        %v499 = vpop.xlane.xlu0 %498
        %v500 = vsel %vm411, %v485, 0.0
        %501 = vadd.xlane.f32.xlu0 %v500
        %v502 = vpop.xlane.xlu0 %501
        %v503 = vsel %vm411, %v486, 0.0
        %504 = vadd.xlane.f32.xlu0 %v503
        %v505 = vpop.xlane.xlu0 %504
        %v506 = vsel %vm411, %v487, 0.0
        %507 = vadd.xlane.f32.xlu0 %v506
        %v508 = vpop.xlane.xlu0 %507
        %v509 = vsel %vm411, %v488, 0.0
        %510 = vadd.xlane.f32.xlu0 %v509
        %v511 = vpop.xlane.xlu0 %510
        %v512 = vsel %vm411, %v489, 0.0
        %513 = vadd.xlane.f32.xlu0 %v512
        %v514 = vpop.xlane.xlu0 %513
        %v515 = vsel %vm411, %v490, 0.0
        %516 = vadd.xlane.f32.xlu0 %v515
        %v517 = vpop.xlane.xlu0 %516
        %v518 = vsel %vm411, %v491, 0.0
        %519 = vadd.xlane.f32.xlu0 %v518
        %v520 = vpop.xlane.xlu0 %519
        %v521 = vsel %vm411, %v492, 0.0
        %522 = vadd.xlane.f32.xlu0 %v521
        %v523 = vpop.xlane.xlu0 %522
        %v524 = vsel %vm411, %v493, 0.0
        %525 = vadd.xlane.f32.xlu0 %v524
        %v526 = vpop.xlane.xlu0 %525
        %v527 = vsel %vm411, %v494, 0.0
        %528 = vadd.xlane.f32.xlu0 %v527
        %v529 = vpop.xlane.xlu0 %528
        %v530 = vsel %vm411, %v495, 0.0
        %531 = vadd.xlane.f32.xlu0 %v530
        %v532 = vpop.xlane.xlu0 %531
        %v533 = vsel %vm411, %v496, 0.0
        %534 = vadd.xlane.f32.xlu0 %v533
        %v535 = vpop.xlane.xlu0 %534
        %v536 = vmul.f32 %v499, %v457
        %v537 = vmul.f32 %v502, %v457
        %v538 = vmul.f32 %v505, %v457
        %v539 = vmul.f32 %v508, %v457
        %v540 = vmul.f32 %v511, %v457
        %v541 = vmul.f32 %v514, %v457
        %v542 = vmul.f32 %v517, %v457
        %v543 = vmul.f32 %v520, %v457
        %v544 = vmul.f32 %v523, %v457
        %v545 = vmul.f32 %v526, %v457
        %v546 = vmul.f32 %v529, %v457
        %v547 = vmul.f32 %v532, %v457
        %v548 = vmul.f32 %v535, %v457
        %v549 = vadd.f32 %v536, 1e-05
        %v550 = vadd.f32 %v537, 1e-05
        %v551 = vadd.f32 %v538, 1e-05
        %v552 = vadd.f32 %v539, 1e-05
        %v553 = vadd.f32 %v540, 1e-05
        %v554 = vadd.f32 %v541, 1e-05
        %v555 = vadd.f32 %v542, 1e-05
        %v556 = vadd.f32 %v543, 1e-05
        %v557 = vadd.f32 %v544, 1e-05
        %v558 = vadd.f32 %v545, 1e-05
        %v559 = vadd.f32 %v546, 1e-05
        %v560 = vadd.f32 %v547, 1e-05
        %v561 = vadd.f32 %v548, 1e-05
        %v562 = vrsqrt.pop %v549
        %v563 = vmul.f32 %v562, %v549
        %v564 = vmul.f32 %v563, %v562
        %v565 = vmul.f32 0.5, %v564
        %v566 = vsub.f32 1.5, %v565
        %v567 = vmul.f32 %v562, %v566
        %vm568 = vweird.f32 %v549
        %vm569 = vweird.f32 %v562
        %vm570 = vmor %vm568, %vm569
        %v571 = vsel %vm570, %v562, %v567
        %v572 = vrsqrt.pop %v550
        %v573 = vmul.f32 %v572, %v550
        %v574 = vmul.f32 %v573, %v572
        %v575 = vmul.f32 0.5, %v574
        %v576 = vsub.f32 1.5, %v575
        %v577 = vmul.f32 %v572, %v576
        %vm578 = vweird.f32 %v550
        %vm579 = vweird.f32 %v572
        %vm580 = vmor %vm578, %vm579
        %v581 = vsel %vm580, %v572, %v577
        %v582 = vrsqrt.pop %v551
        %v583 = vmul.f32 %v582, %v551
        %v584 = vmul.f32 %v583, %v582
        %v585 = vmul.f32 0.5, %v584
        %v586 = vsub.f32 1.5, %v585
        %v587 = vmul.f32 %v582, %v586
        %vm588 = vweird.f32 %v551
        %vm589 = vweird.f32 %v582
        %vm590 = vmor %vm588, %vm589
        %v591 = vsel %vm590, %v582, %v587
        %v592 = vrsqrt.pop %v552
        %v593 = vmul.f32 %v592, %v552
        %v594 = vmul.f32 %v593, %v592
        %v595 = vmul.f32 0.5, %v594
        %v596 = vsub.f32 1.5, %v595
        %v597 = vmul.f32 %v592, %v596
        %vm598 = vweird.f32 %v552
        %vm599 = vweird.f32 %v592
        %vm600 = vmor %vm598, %vm599
        %v601 = vsel %vm600, %v592, %v597
        %v602 = vrsqrt.pop %v553
        %v603 = vmul.f32 %v602, %v553
        %v604 = vmul.f32 %v603, %v602
        %v605 = vmul.f32 0.5, %v604
        %v606 = vsub.f32 1.5, %v605
        %v607 = vmul.f32 %v602, %v606
        %vm608 = vweird.f32 %v553
        %vm609 = vweird.f32 %v602
        %vm610 = vmor %vm608, %vm609
        %v611 = vsel %vm610, %v602, %v607
        %v612 = vrsqrt.pop %v554
        %v613 = vmul.f32 %v612, %v554
        %v614 = vmul.f32 %v613, %v612
        %v615 = vmul.f32 0.5, %v614
        %v616 = vsub.f32 1.5, %v615
        %v617 = vmul.f32 %v612, %v616
        %vm618 = vweird.f32 %v554
        %vm619 = vweird.f32 %v612
        %vm620 = vmor %vm618, %vm619
        %v621 = vsel %vm620, %v612, %v617
        %v622 = vrsqrt.pop %v555
        %v623 = vmul.f32 %v622, %v555
        %v624 = vmul.f32 %v623, %v622
        %v625 = vmul.f32 0.5, %v624
        %v626 = vsub.f32 1.5, %v625
        %v627 = vmul.f32 %v622, %v626
        %vm628 = vweird.f32 %v555
        %vm629 = vweird.f32 %v622
        %vm630 = vmor %vm628, %vm629
        %v631 = vsel %vm630, %v622, %v627
        %v632 = vrsqrt.pop %v556
        %v633 = vmul.f32 %v632, %v556
        %v634 = vmul.f32 %v633, %v632
        %v635 = vmul.f32 0.5, %v634
        %v636 = vsub.f32 1.5, %v635
        %v637 = vmul.f32 %v632, %v636
        %vm638 = vweird.f32 %v556
        %vm639 = vweird.f32 %v632
        %vm640 = vmor %vm638, %vm639
        %v641 = vsel %vm640, %v632, %v637
        %v642 = vrsqrt.pop %v557
        %v643 = vmul.f32 %v642, %v557
        %v644 = vmul.f32 %v643, %v642
        %v645 = vmul.f32 0.5, %v644
        %v646 = vsub.f32 1.5, %v645
        %v647 = vmul.f32 %v642, %v646
        %vm648 = vweird.f32 %v557
        %vm649 = vweird.f32 %v642
        %vm650 = vmor %vm648, %vm649
        %v651 = vsel %vm650, %v642, %v647
        %v652 = vrsqrt.pop %v558
        %v653 = vmul.f32 %v652, %v558
        %v654 = vmul.f32 %v653, %v652
        %v655 = vmul.f32 0.5, %v654
        %v656 = vsub.f32 1.5, %v655
        %v657 = vmul.f32 %v652, %v656
        %vm658 = vweird.f32 %v558
        %vm659 = vweird.f32 %v652
        %vm660 = vmor %vm658, %vm659
        %v661 = vsel %vm660, %v652, %v657
        %v662 = vrsqrt.pop %v559
        %v663 = vmul.f32 %v662, %v559
        %v664 = vmul.f32 %v663, %v662
        %v665 = vmul.f32 0.5, %v664
        %v666 = vsub.f32 1.5, %v665
        %v667 = vmul.f32 %v662, %v666
        %vm668 = vweird.f32 %v559
        %vm669 = vweird.f32 %v662
        %vm670 = vmor %vm668, %vm669
        %v671 = vsel %vm670, %v662, %v667
        %v672 = vrsqrt.pop %v560
        %v673 = vmul.f32 %v672, %v560
        %v674 = vmul.f32 %v673, %v672
        %v675 = vmul.f32 0.5, %v674
        %v676 = vsub.f32 1.5, %v675
        %v677 = vmul.f32 %v672, %v676
        %vm678 = vweird.f32 %v560
        %vm679 = vweird.f32 %v672
        %vm680 = vmor %vm678, %vm679
        %v681 = vsel %vm680, %v672, %v677
        %v682 = vrsqrt.pop %v561
        %v683 = vmul.f32 %v682, %v561
        %v684 = vmul.f32 %v683, %v682
        %v685 = vmul.f32 0.5, %v684
        %v686 = vsub.f32 1.5, %v685
        %v687 = vmul.f32 %v682, %v686
        %vm688 = vweird.f32 %v561
        %vm689 = vweird.f32 %v682
        %vm690 = vmor %vm688, %vm689
        %v691 = vsel %vm690, %v682, %v687
        %v692 = vmul.f32 %v471, %v571
        %v693 = vmul.f32 %v472, %v581
        %v694 = vmul.f32 %v473, %v591
        %v695 = vmul.f32 %v474, %v601
        %v696 = vmul.f32 %v475, %v611
        %v697 = vmul.f32 %v476, %v621
        %v698 = vmul.f32 %v477, %v631
        %v699 = vmul.f32 %v478, %v641
        %v700 = vmul.f32 %v479, %v651
        %v701 = vmul.f32 %v480, %v661
        %v702 = vmul.f32 %v481, %v671
        %v703 = vmul.f32 %v482, %v681
        %v704 = vmul.f32 %v483, %v691
        %v705 = vld [vmem:[%s7 + $0x1] sm:$0x1]
        %v706 = vperm.slane %v705, 0
        %v707 = vmul.f32 %v692, %v706
        %v708 = vmul.f32 %v693, %v706
        %v709 = vmul.f32 %v694, %v706
        %v710 = vmul.f32 %v695, %v706
        %v711 = vmul.f32 %v696, %v706
        %v712 = vmul.f32 %v697, %v706
        %v713 = vmul.f32 %v698, %v706
        %v714 = vmul.f32 %v699, %v706
        %v715 = vmul.f32 %v700, %v706
        %v716 = vmul.f32 %v701, %v706
        %v717 = vmul.f32 %v702, %v706
        %v718 = vmul.f32 %v703, %v706
        %v719 = vmul.f32 %v704, %v706
        %v720 = vld [vmem:[%s7 + $0x2] sm:$0x1]
        %v721 = vperm.slane %v720, 0
        %v722 = vadd.f32 %v707, %v721
        %v723 = vadd.f32 %v708, %v721
        %v724 = vadd.f32 %v709, %v721
        %v725 = vadd.f32 %v710, %v721
        %v726 = vadd.f32 %v711, %v721
        %v727 = vadd.f32 %v712, %v721
        %v728 = vadd.f32 %v713, %v721
        %v729 = vadd.f32 %v714, %v721
        %v730 = vadd.f32 %v715, %v721
        %v731 = vadd.f32 %v716, %v721
        %v732 = vadd.f32 %v717, %v721
        %v733 = vadd.f32 %v718, %v721
        %v734 = vadd.f32 %v719, %v721
        %vm735 = vcmp.ge.f32.partialorder %v722, 0.0
        %vm736 = vcmp.ge.f32.partialorder %v723, 0.0
        %vm737 = vcmp.ge.f32.partialorder %v724, 0.0
        %vm738 = vcmp.ge.f32.partialorder %v725, 0.0
        %vm739 = vcmp.ge.f32.partialorder %v726, 0.0
        %vm740 = vcmp.ge.f32.partialorder %v727, 0.0
        %vm741 = vcmp.ge.f32.partialorder %v728, 0.0
        %vm742 = vcmp.ge.f32.partialorder %v729, 0.0
        %vm743 = vcmp.ge.f32.partialorder %v730, 0.0
        %vm744 = vcmp.ge.f32.partialorder %v731, 0.0
        %vm745 = vcmp.ge.f32.partialorder %v732, 0.0
        %vm746 = vcmp.ge.f32.partialorder %v733, 0.0
        %vm747 = vcmp.ge.f32.partialorder %v734, 0.0
        %v748 = vmul.f32 %v722, 0.01
        %v749 = vmul.f32 %v723, 0.01
        %v750 = vmul.f32 %v724, 0.01
        %v751 = vmul.f32 %v725, 0.01
        %v752 = vmul.f32 %v726, 0.01
        %v753 = vmul.f32 %v727, 0.01
        %v754 = vmul.f32 %v728, 0.01
        %v755 = vmul.f32 %v729, 0.01
        %v756 = vmul.f32 %v730, 0.01
        %v757 = vmul.f32 %v731, 0.01
        %v758 = vmul.f32 %v732, 0.01
        %v759 = vmul.f32 %v733, 0.01
        %v760 = vmul.f32 %v734, 0.01
        %v761 = vsel %vm735, %v722, %v748
        %v762 = vsel %vm736, %v723, %v749
        %v763 = vsel %vm737, %v724, %v750
        %v764 = vsel %vm738, %v725, %v751
        %v765 = vsel %vm739, %v726, %v752
        %v766 = vsel %vm740, %v727, %v753
        %v767 = vsel %vm741, %v728, %v754
        %v768 = vsel %vm742, %v729, %v755
        %v769 = vsel %vm743, %v730, %v756
        %v770 = vsel %vm744, %v731, %v757
        %v771 = vsel %vm745, %v732, %v758
        %v772 = vsel %vm746, %v733, %v759
        %v773 = vsel %vm747, %v734, %v760
        %v774 = vpack.c.bf16 %v762, %v761
        %v775 = vpack.c.bf16 %v764, %v763
        %v776 = vpack.c.bf16 %v766, %v765
        %v777 = vpack.c.bf16 %v768, %v767
        %v778 = vpack.c.bf16 %v770, %v769
        %v779 = vpack.c.bf16 %v772, %v771
        %v780 = vpack.c.bf16 %v773, %v773
        %v781 = vld [vmem:[%s2] sm:$0xf]
        %v782 = vld [vmem:[%s2 + $0x4] sm:$0xf]
        %v783 = vld [vmem:[%s2 + $0x8] sm:$0xf]
        %v784 = vld [vmem:[%s2 + $0xc] sm:$0xf]
        %v785 = vld [vmem:[%s2 + $0x10] sm:$0xf]
        %v786 = vld [vmem:[%s2 + $0x14] sm:$0xf]
        %v787 = vld [vmem:[%s2 + $0x18] sm:$0xf]
        %v788 = vld [vmem:[%s2 + $0x1c] sm:$0xf]
        %v789 = vld [vmem:[%s7 + $0x3] sm:$0x1]
        %v790 = vperm.slane %v789, 0
        %v799 = vunpack.c.l.b16 %v781
        %v800 = vunpack.c.l.b16 %v782
        %v801 = vunpack.c.l.b16 %v783
        %v802 = vunpack.c.l.b16 %v784
        %v803 = vunpack.c.l.b16 %v785
        %v804 = vunpack.c.l.b16 %v786
        %v805 = vunpack.c.l.b16 %v787
        %v806 = vunpack.c.l.b16 %v788
        %v807 = vpack.c.b16 %v800, %v799
        %v808 = vpack.c.b16 %v802, %v801
        %v809 = vpack.c.b16 %v804, %v803
        %v810 = vpack.c.b16 %v806, %v805
        %v816 = vsel %vm411, %v774, 0
        %v819 = vsel %vm411, %v775, 0
        %v822 = vsel %vm411, %v776, 0
        %v825 = vsel %vm411, %v777, 0
        %v828 = vsel %vm411, %v778, 0
        %v831 = vsel %vm411, %v779, 0
        %v834 = vsel %vm411, %v780, 0
        %836 = vmatpush.bf16.msra.mxu0 0
        %837 = vmatpush.bf16.msra.mxu0 0
        %838 = vmatpush.bf16.msra.mxu0 0
        %839 = vmatpush.bf16.msra.mxu0 0
        %840 = vmatpush.bf16.msra.mxu0 %v810
        %841 = vmatpush.bf16.msra.mxu0 %v809
        %842 = vmatpush.bf16.msra.mxu0 %v808
        %843 = vmatpush.bf16.msra.mxu0 %v807
        %844 = vmatmul.bf16.gmra.mxu0 %v816
        %v845 = vpop.f32.mrf.mxu0
        %v846 = vadd.f32 %v790, %v845
        %v847 = vpop.f32.mrf.mxu0
        %v848 = vadd.f32 %v790, %v847
        %849 = vmatmul.bf16.gmra.mxu0 %v819
        %v850 = vpop.f32.mrf.mxu0
        %v851 = vadd.f32 %v790, %v850
        %v852 = vpop.f32.mrf.mxu0
        %v853 = vadd.f32 %v790, %v852
        %854 = vmatmul.bf16.gmra.mxu0 %v822
        %v855 = vpop.f32.mrf.mxu0
        %v856 = vadd.f32 %v790, %v855
        %v857 = vpop.f32.mrf.mxu0
        %v858 = vadd.f32 %v790, %v857
        %859 = vmatmul.bf16.gmra.mxu0 %v825
        %v860 = vpop.f32.mrf.mxu0
        %v861 = vadd.f32 %v790, %v860
        %v862 = vpop.f32.mrf.mxu0
        %v863 = vadd.f32 %v790, %v862
        %864 = vmatmul.bf16.gmra.mxu0 %v828
        %v865 = vpop.f32.mrf.mxu0
        %v866 = vadd.f32 %v790, %v865
        %v867 = vpop.f32.mrf.mxu0
        %v868 = vadd.f32 %v790, %v867
        %869 = vmatmul.bf16.gmra.mxu0 %v831
        %v870 = vpop.f32.mrf.mxu0
        %v871 = vadd.f32 %v790, %v870
        %v872 = vpop.f32.mrf.mxu0
        %v873 = vadd.f32 %v790, %v872
        %874 = vmatmul.bf16.gmra.mxu0 %v834
        %v875 = vpop.f32.mrf.mxu0
        %v876 = vadd.f32 %v790, %v875
        %v877 = vpop.f32.mrf.mxu0
        %878 = vdwg.mxu0
        %v879 = vsel %vm411, %v846, 0.0
        %880 = vadd.xlane.f32.xlu0 %v879
        %v881 = vpop.xlane.xlu0 %880
        %v882 = vsel %vm411, %v848, 0.0
        %883 = vadd.xlane.f32.xlu0 %v882
        %v884 = vpop.xlane.xlu0 %883
        %v885 = vsel %vm411, %v851, 0.0
        %886 = vadd.xlane.f32.xlu0 %v885
        %v887 = vpop.xlane.xlu0 %886
        %v888 = vsel %vm411, %v853, 0.0
        %889 = vadd.xlane.f32.xlu0 %v888
        %v890 = vpop.xlane.xlu0 %889
        %v891 = vsel %vm411, %v856, 0.0
        %892 = vadd.xlane.f32.xlu0 %v891
        %v893 = vpop.xlane.xlu0 %892
        %v894 = vsel %vm411, %v858, 0.0
        %895 = vadd.xlane.f32.xlu0 %v894
        %v896 = vpop.xlane.xlu0 %895
        %v897 = vsel %vm411, %v861, 0.0
        %898 = vadd.xlane.f32.xlu0 %v897
        %v899 = vpop.xlane.xlu0 %898
        %v900 = vsel %vm411, %v863, 0.0
        %901 = vadd.xlane.f32.xlu0 %v900
        %v902 = vpop.xlane.xlu0 %901
        %v903 = vsel %vm411, %v866, 0.0
        %904 = vadd.xlane.f32.xlu0 %v903
        %v905 = vpop.xlane.xlu0 %904
        %v906 = vsel %vm411, %v868, 0.0
        %907 = vadd.xlane.f32.xlu0 %v906
        %v908 = vpop.xlane.xlu0 %907
        %v909 = vsel %vm411, %v871, 0.0
        %910 = vadd.xlane.f32.xlu0 %v909
        %v911 = vpop.xlane.xlu0 %910
        %v912 = vsel %vm411, %v873, 0.0
        %913 = vadd.xlane.f32.xlu0 %v912
        %v914 = vpop.xlane.xlu0 %913
        %v915 = vsel %vm411, %v876, 0.0
        %916 = vadd.xlane.f32.xlu0 %v915
        %v917 = vpop.xlane.xlu0 %916
        %v918 = vmul.f32 %v881, %v457
        %v919 = vmul.f32 %v884, %v457
        %v920 = vmul.f32 %v887, %v457
        %v921 = vmul.f32 %v890, %v457
        %v922 = vmul.f32 %v893, %v457
        %v923 = vmul.f32 %v896, %v457
        %v924 = vmul.f32 %v899, %v457
        %v925 = vmul.f32 %v902, %v457
        %v926 = vmul.f32 %v905, %v457
        %v927 = vmul.f32 %v908, %v457
        %v928 = vmul.f32 %v911, %v457
        %v929 = vmul.f32 %v914, %v457
        %v930 = vmul.f32 %v917, %v457
        %v931 = vsub.f32 %v846, %v918
        %v932 = vsub.f32 %v848, %v919
        %v933 = vsub.f32 %v851, %v920
        %v934 = vsub.f32 %v853, %v921
        %v935 = vsub.f32 %v856, %v922
        %v936 = vsub.f32 %v858, %v923
        %v937 = vsub.f32 %v861, %v924
        %v938 = vsub.f32 %v863, %v925
        %v939 = vsub.f32 %v866, %v926
        %v940 = vsub.f32 %v868, %v927
        %v941 = vsub.f32 %v871, %v928
        %v942 = vsub.f32 %v873, %v929
        %v943 = vsub.f32 %v876, %v930
        %v944 = vmul.f32 %v931, %v931
        %v945 = vmul.f32 %v932, %v932
        %v946 = vmul.f32 %v933, %v933
        %v947 = vmul.f32 %v934, %v934
        %v948 = vmul.f32 %v935, %v935
        %v949 = vmul.f32 %v936, %v936
        %v950 = vmul.f32 %v937, %v937
        %v951 = vmul.f32 %v938, %v938
        %v952 = vmul.f32 %v939, %v939
        %v953 = vmul.f32 %v940, %v940
        %v954 = vmul.f32 %v941, %v941
        %v955 = vmul.f32 %v942, %v942
        %v956 = vmul.f32 %v943, %v943
        %v957 = vsel %vm411, %v944, 0.0
        %958 = vadd.xlane.f32.xlu0 %v957
        %v959 = vpop.xlane.xlu0 %958
        %v960 = vsel %vm411, %v945, 0.0
        %961 = vadd.xlane.f32.xlu0 %v960
        %v962 = vpop.xlane.xlu0 %961
        %v963 = vsel %vm411, %v946, 0.0
        %964 = vadd.xlane.f32.xlu0 %v963
        %v965 = vpop.xlane.xlu0 %964
        %v966 = vsel %vm411, %v947, 0.0
        %967 = vadd.xlane.f32.xlu0 %v966
        %v968 = vpop.xlane.xlu0 %967
        %v969 = vsel %vm411, %v948, 0.0
        %970 = vadd.xlane.f32.xlu0 %v969
        %v971 = vpop.xlane.xlu0 %970
        %v972 = vsel %vm411, %v949, 0.0
        %973 = vadd.xlane.f32.xlu0 %v972
        %v974 = vpop.xlane.xlu0 %973
        %v975 = vsel %vm411, %v950, 0.0
        %976 = vadd.xlane.f32.xlu0 %v975
        %v977 = vpop.xlane.xlu0 %976
        %v978 = vsel %vm411, %v951, 0.0
        %979 = vadd.xlane.f32.xlu0 %v978
        %v980 = vpop.xlane.xlu0 %979
        %v981 = vsel %vm411, %v952, 0.0
        %982 = vadd.xlane.f32.xlu0 %v981
        %v983 = vpop.xlane.xlu0 %982
        %v984 = vsel %vm411, %v953, 0.0
        %985 = vadd.xlane.f32.xlu0 %v984
        %v986 = vpop.xlane.xlu0 %985
        %v987 = vsel %vm411, %v954, 0.0
        %988 = vadd.xlane.f32.xlu0 %v987
        %v989 = vpop.xlane.xlu0 %988
        %v990 = vsel %vm411, %v955, 0.0
        %991 = vadd.xlane.f32.xlu0 %v990
        %v992 = vpop.xlane.xlu0 %991
        %v993 = vsel %vm411, %v956, 0.0
        %994 = vadd.xlane.f32.xlu0 %v993
        %v995 = vpop.xlane.xlu0 %994
        %v996 = vmul.f32 %v959, %v457
        %v997 = vmul.f32 %v962, %v457
        %v998 = vmul.f32 %v965, %v457
        %v999 = vmul.f32 %v968, %v457
        %v1000 = vmul.f32 %v971, %v457
        %v1001 = vmul.f32 %v974, %v457
        %v1002 = vmul.f32 %v977, %v457
        %v1003 = vmul.f32 %v980, %v457
        %v1004 = vmul.f32 %v983, %v457
        %v1005 = vmul.f32 %v986, %v457
        %v1006 = vmul.f32 %v989, %v457
        %v1007 = vmul.f32 %v992, %v457
        %v1008 = vmul.f32 %v995, %v457
        %v1009 = vadd.f32 %v996, 1e-05
        %v1010 = vadd.f32 %v997, 1e-05
        %v1011 = vadd.f32 %v998, 1e-05
        %v1012 = vadd.f32 %v999, 1e-05
        %v1013 = vadd.f32 %v1000, 1e-05
        %v1014 = vadd.f32 %v1001, 1e-05
        %v1015 = vadd.f32 %v1002, 1e-05
        %v1016 = vadd.f32 %v1003, 1e-05
        %v1017 = vadd.f32 %v1004, 1e-05
        %v1018 = vadd.f32 %v1005, 1e-05
        %v1019 = vadd.f32 %v1006, 1e-05
        %v1020 = vadd.f32 %v1007, 1e-05
        %v1021 = vadd.f32 %v1008, 1e-05
        %v1022 = vrsqrt.pop %v1009
        %v1023 = vmul.f32 %v1022, %v1009
        %v1024 = vmul.f32 %v1023, %v1022
        %v1025 = vmul.f32 0.5, %v1024
        %v1026 = vsub.f32 1.5, %v1025
        %v1027 = vmul.f32 %v1022, %v1026
        %vm1028 = vweird.f32 %v1009
        %vm1029 = vweird.f32 %v1022
        %vm1030 = vmor %vm1028, %vm1029
        %v1031 = vsel %vm1030, %v1022, %v1027
        %v1032 = vrsqrt.pop %v1010
        %v1033 = vmul.f32 %v1032, %v1010
        %v1034 = vmul.f32 %v1033, %v1032
        %v1035 = vmul.f32 0.5, %v1034
        %v1036 = vsub.f32 1.5, %v1035
        %v1037 = vmul.f32 %v1032, %v1036
        %vm1038 = vweird.f32 %v1010
        %vm1039 = vweird.f32 %v1032
        %vm1040 = vmor %vm1038, %vm1039
        %v1041 = vsel %vm1040, %v1032, %v1037
        %v1042 = vrsqrt.pop %v1011
        %v1043 = vmul.f32 %v1042, %v1011
        %v1044 = vmul.f32 %v1043, %v1042
        %v1045 = vmul.f32 0.5, %v1044
        %v1046 = vsub.f32 1.5, %v1045
        %v1047 = vmul.f32 %v1042, %v1046
        %vm1048 = vweird.f32 %v1011
        %vm1049 = vweird.f32 %v1042
        %vm1050 = vmor %vm1048, %vm1049
        %v1051 = vsel %vm1050, %v1042, %v1047
        %v1052 = vrsqrt.pop %v1012
        %v1053 = vmul.f32 %v1052, %v1012
        %v1054 = vmul.f32 %v1053, %v1052
        %v1055 = vmul.f32 0.5, %v1054
        %v1056 = vsub.f32 1.5, %v1055
        %v1057 = vmul.f32 %v1052, %v1056
        %vm1058 = vweird.f32 %v1012
        %vm1059 = vweird.f32 %v1052
        %vm1060 = vmor %vm1058, %vm1059
        %v1061 = vsel %vm1060, %v1052, %v1057
        %v1062 = vrsqrt.pop %v1013
        %v1063 = vmul.f32 %v1062, %v1013
        %v1064 = vmul.f32 %v1063, %v1062
        %v1065 = vmul.f32 0.5, %v1064
        %v1066 = vsub.f32 1.5, %v1065
        %v1067 = vmul.f32 %v1062, %v1066
        %vm1068 = vweird.f32 %v1013
        %vm1069 = vweird.f32 %v1062
        %vm1070 = vmor %vm1068, %vm1069
        %v1071 = vsel %vm1070, %v1062, %v1067
        %v1072 = vrsqrt.pop %v1014
        %v1073 = vmul.f32 %v1072, %v1014
        %v1074 = vmul.f32 %v1073, %v1072
        %v1075 = vmul.f32 0.5, %v1074
        %v1076 = vsub.f32 1.5, %v1075
        %v1077 = vmul.f32 %v1072, %v1076
        %vm1078 = vweird.f32 %v1014
        %vm1079 = vweird.f32 %v1072
        %vm1080 = vmor %vm1078, %vm1079
        %v1081 = vsel %vm1080, %v1072, %v1077
        %v1082 = vrsqrt.pop %v1015
        %v1083 = vmul.f32 %v1082, %v1015
        %v1084 = vmul.f32 %v1083, %v1082
        %v1085 = vmul.f32 0.5, %v1084
        %v1086 = vsub.f32 1.5, %v1085
        %v1087 = vmul.f32 %v1082, %v1086
        %vm1088 = vweird.f32 %v1015
        %vm1089 = vweird.f32 %v1082
        %vm1090 = vmor %vm1088, %vm1089
        %v1091 = vsel %vm1090, %v1082, %v1087
        %v1092 = vrsqrt.pop %v1016
        %v1093 = vmul.f32 %v1092, %v1016
        %v1094 = vmul.f32 %v1093, %v1092
        %v1095 = vmul.f32 0.5, %v1094
        %v1096 = vsub.f32 1.5, %v1095
        %v1097 = vmul.f32 %v1092, %v1096
        %vm1098 = vweird.f32 %v1016
        %vm1099 = vweird.f32 %v1092
        %vm1100 = vmor %vm1098, %vm1099
        %v1101 = vsel %vm1100, %v1092, %v1097
        %v1102 = vrsqrt.pop %v1017
        %v1103 = vmul.f32 %v1102, %v1017
        %v1104 = vmul.f32 %v1103, %v1102
        %v1105 = vmul.f32 0.5, %v1104
        %v1106 = vsub.f32 1.5, %v1105
        %v1107 = vmul.f32 %v1102, %v1106
        %vm1108 = vweird.f32 %v1017
        %vm1109 = vweird.f32 %v1102
        %vm1110 = vmor %vm1108, %vm1109
        %v1111 = vsel %vm1110, %v1102, %v1107
        %v1112 = vrsqrt.pop %v1018
        %v1113 = vmul.f32 %v1112, %v1018
        %v1114 = vmul.f32 %v1113, %v1112
        %v1115 = vmul.f32 0.5, %v1114
        %v1116 = vsub.f32 1.5, %v1115
        %v1117 = vmul.f32 %v1112, %v1116
        %vm1118 = vweird.f32 %v1018
        %vm1119 = vweird.f32 %v1112
        %vm1120 = vmor %vm1118, %vm1119
        %v1121 = vsel %vm1120, %v1112, %v1117
        %v1122 = vrsqrt.pop %v1019
        %v1123 = vmul.f32 %v1122, %v1019
        %v1124 = vmul.f32 %v1123, %v1122
        %v1125 = vmul.f32 0.5, %v1124
        %v1126 = vsub.f32 1.5, %v1125
        %v1127 = vmul.f32 %v1122, %v1126
        %vm1128 = vweird.f32 %v1019
        %vm1129 = vweird.f32 %v1122
        %vm1130 = vmor %vm1128, %vm1129
        %v1131 = vsel %vm1130, %v1122, %v1127
        %v1132 = vrsqrt.pop %v1020
        %v1133 = vmul.f32 %v1132, %v1020
        %v1134 = vmul.f32 %v1133, %v1132
        %v1135 = vmul.f32 0.5, %v1134
        %v1136 = vsub.f32 1.5, %v1135
        %v1137 = vmul.f32 %v1132, %v1136
        %vm1138 = vweird.f32 %v1020
        %vm1139 = vweird.f32 %v1132
        %vm1140 = vmor %vm1138, %vm1139
        %v1141 = vsel %vm1140, %v1132, %v1137
        %v1142 = vrsqrt.pop %v1021
        %v1143 = vmul.f32 %v1142, %v1021
        %v1144 = vmul.f32 %v1143, %v1142
        %v1145 = vmul.f32 0.5, %v1144
        %v1146 = vsub.f32 1.5, %v1145
        %v1147 = vmul.f32 %v1142, %v1146
        %vm1148 = vweird.f32 %v1021
        %vm1149 = vweird.f32 %v1142
        %vm1150 = vmor %vm1148, %vm1149
        %v1151 = vsel %vm1150, %v1142, %v1147
        %v1152 = vmul.f32 %v931, %v1031
        %v1153 = vmul.f32 %v932, %v1041
        %v1154 = vmul.f32 %v933, %v1051
        %v1155 = vmul.f32 %v934, %v1061
        %v1156 = vmul.f32 %v935, %v1071
        %v1157 = vmul.f32 %v936, %v1081
        %v1158 = vmul.f32 %v937, %v1091
        %v1159 = vmul.f32 %v938, %v1101
        %v1160 = vmul.f32 %v939, %v1111
        %v1161 = vmul.f32 %v940, %v1121
        %v1162 = vmul.f32 %v941, %v1131
        %v1163 = vmul.f32 %v942, %v1141
        %v1164 = vmul.f32 %v943, %v1151
        %v1165 = vld [vmem:[%s7 + $0x4] sm:$0x1]
        %v1166 = vperm.slane %v1165, 0
        %v1167 = vmul.f32 %v1152, %v1166
        %v1168 = vmul.f32 %v1153, %v1166
        %v1169 = vmul.f32 %v1154, %v1166
        %v1170 = vmul.f32 %v1155, %v1166
        %v1171 = vmul.f32 %v1156, %v1166
        %v1172 = vmul.f32 %v1157, %v1166
        %v1173 = vmul.f32 %v1158, %v1166
        %v1174 = vmul.f32 %v1159, %v1166
        %v1175 = vmul.f32 %v1160, %v1166
        %v1176 = vmul.f32 %v1161, %v1166
        %v1177 = vmul.f32 %v1162, %v1166
        %v1178 = vmul.f32 %v1163, %v1166
        %v1179 = vmul.f32 %v1164, %v1166
        %v1180 = vld [vmem:[%s7 + $0x5] sm:$0x1]
        %v1181 = vperm.slane %v1180, 0
        %v1182 = vadd.f32 %v1167, %v1181
        %v1183 = vadd.f32 %v1168, %v1181
        %v1184 = vadd.f32 %v1169, %v1181
        %v1185 = vadd.f32 %v1170, %v1181
        %v1186 = vadd.f32 %v1171, %v1181
        %v1187 = vadd.f32 %v1172, %v1181
        %v1188 = vadd.f32 %v1173, %v1181
        %v1189 = vadd.f32 %v1174, %v1181
        %v1190 = vadd.f32 %v1175, %v1181
        %v1191 = vadd.f32 %v1176, %v1181
        %v1192 = vadd.f32 %v1177, %v1181
        %v1193 = vadd.f32 %v1178, %v1181
        %v1194 = vadd.f32 %v1179, %v1181
        %vm1195 = vcmp.ge.f32.partialorder %v1182, 0.0
        %vm1196 = vcmp.ge.f32.partialorder %v1183, 0.0
        %vm1197 = vcmp.ge.f32.partialorder %v1184, 0.0
        %vm1198 = vcmp.ge.f32.partialorder %v1185, 0.0
        %vm1199 = vcmp.ge.f32.partialorder %v1186, 0.0
        %vm1200 = vcmp.ge.f32.partialorder %v1187, 0.0
        %vm1201 = vcmp.ge.f32.partialorder %v1188, 0.0
        %vm1202 = vcmp.ge.f32.partialorder %v1189, 0.0
        %vm1203 = vcmp.ge.f32.partialorder %v1190, 0.0
        %vm1204 = vcmp.ge.f32.partialorder %v1191, 0.0
        %vm1205 = vcmp.ge.f32.partialorder %v1192, 0.0
        %vm1206 = vcmp.ge.f32.partialorder %v1193, 0.0
        %vm1207 = vcmp.ge.f32.partialorder %v1194, 0.0
        %v1208 = vmul.f32 %v1182, 0.01
        %v1209 = vmul.f32 %v1183, 0.01
        %v1210 = vmul.f32 %v1184, 0.01
        %v1211 = vmul.f32 %v1185, 0.01
        %v1212 = vmul.f32 %v1186, 0.01
        %v1213 = vmul.f32 %v1187, 0.01
        %v1214 = vmul.f32 %v1188, 0.01
        %v1215 = vmul.f32 %v1189, 0.01
        %v1216 = vmul.f32 %v1190, 0.01
        %v1217 = vmul.f32 %v1191, 0.01
        %v1218 = vmul.f32 %v1192, 0.01
        %v1219 = vmul.f32 %v1193, 0.01
        %v1220 = vmul.f32 %v1194, 0.01
        %v1221 = vsel %vm1195, %v1182, %v1208
        %v1222 = vsel %vm1196, %v1183, %v1209
        %v1223 = vsel %vm1197, %v1184, %v1210
        %v1224 = vsel %vm1198, %v1185, %v1211
        %v1225 = vsel %vm1199, %v1186, %v1212
        %v1226 = vsel %vm1200, %v1187, %v1213
        %v1227 = vsel %vm1201, %v1188, %v1214
        %v1228 = vsel %vm1202, %v1189, %v1215
        %v1229 = vsel %vm1203, %v1190, %v1216
        %v1230 = vsel %vm1204, %v1191, %v1217
        %v1231 = vsel %vm1205, %v1192, %v1218
        %v1232 = vsel %vm1206, %v1193, %v1219
        %v1233 = vsel %vm1207, %v1194, %v1220
        %1247 = vrot.lane.b32.xlu0 %v378, 64
        %v1248 = vpop.permute.xlu0 %1247
        %1249 = vrot.lane.b32.xlu0 %v380, 64
        %v1250 = vpop.permute.xlu0 %1249
        %1251 = vrot.lane.b32.xlu0 %v383, 64
        %v1252 = vpop.permute.xlu0 %1251
        %1253 = vrot.lane.b32.xlu0 %v385, 64
        %v1254 = vpop.permute.xlu0 %1253
        %1255 = vrot.lane.b32.xlu0 %v388, 64
        %v1256 = vpop.permute.xlu0 %1255
        %1257 = vrot.lane.b32.xlu0 %v390, 64
        %v1258 = vpop.permute.xlu0 %1257
        %1259 = vrot.lane.b32.xlu0 %v393, 64
        %v1260 = vpop.permute.xlu0 %1259
        %1261 = vrot.lane.b32.xlu0 %v395, 64
        %v1262 = vpop.permute.xlu0 %1261
        %1263 = vrot.lane.b32.xlu0 %v398, 64
        %v1264 = vpop.permute.xlu0 %1263
        %1265 = vrot.lane.b32.xlu0 %v400, 64
        %v1266 = vpop.permute.xlu0 %1265
        %1267 = vrot.lane.b32.xlu0 %v403, 64
        %v1268 = vpop.permute.xlu0 %1267
        %1269 = vrot.lane.b32.xlu0 %v405, 64
        %v1270 = vpop.permute.xlu0 %1269
        %1271 = vrot.lane.b32.xlu0 %v408, 64
        %v1272 = vpop.permute.xlu0 %1271
        %v1286 = vadd.f32 %v1221, %v1248
        %v1287 = vadd.f32 %v1222, %v1250
        %v1288 = vadd.f32 %v1223, %v1252
        %v1289 = vadd.f32 %v1224, %v1254
        %v1290 = vadd.f32 %v1225, %v1256
        %v1291 = vadd.f32 %v1226, %v1258
        %v1292 = vadd.f32 %v1227, %v1260
        %v1293 = vadd.f32 %v1228, %v1262
        %v1294 = vadd.f32 %v1229, %v1264
        %v1295 = vadd.f32 %v1230, %v1266
        %v1296 = vadd.f32 %v1231, %v1268
        %v1297 = vadd.f32 %v1232, %v1270
        %v1298 = vadd.f32 %v1233, %v1272
        %v1299 = vpack.c.bf16 %v1287, %v1286
        %v1300 = vpack.c.bf16 %v1289, %v1288
        %v1301 = vpack.c.bf16 %v1291, %v1290
        %v1302 = vpack.c.bf16 %v1293, %v1292
        %v1303 = vpack.c.bf16 %v1295, %v1294
        %v1304 = vpack.c.bf16 %v1297, %v1296
        %v1305 = vpack.c.bf16 %v1298, %v1298
        %v1306 = vld [vmem:[%s3] sm:$0xf]
        %v1307 = vld [vmem:[%s3 + $0x4] sm:$0xf]
        %v1308 = vld [vmem:[%s3 + $0x8] sm:$0xf]
        %v1309 = vld [vmem:[%s3 + $0xc] sm:$0xf]
        %v1310 = vld [vmem:[%s3 + $0x10] sm:$0xf]
        %v1311 = vld [vmem:[%s3 + $0x14] sm:$0xf]
        %v1312 = vld [vmem:[%s3 + $0x18] sm:$0xf]
        %v1313 = vld [vmem:[%s3 + $0x1c] sm:$0xf]
        %v1314 = vld [vmem:[%s7 + $0x6] sm:$0x1]
        %v1315 = vperm.slane %v1314, 0
        %v1324 = vunpack.c.l.b16 %v1306
        %v1325 = vunpack.c.l.b16 %v1307
        %v1326 = vunpack.c.l.b16 %v1308
        %v1327 = vunpack.c.l.b16 %v1309
        %v1328 = vunpack.c.l.b16 %v1310
        %v1329 = vunpack.c.l.b16 %v1311
        %v1330 = vunpack.c.l.b16 %v1312
        %v1331 = vunpack.c.l.b16 %v1313
        %v1332 = vpack.c.b16 %v1325, %v1324
        %v1333 = vpack.c.b16 %v1327, %v1326
        %v1334 = vpack.c.b16 %v1329, %v1328
        %v1335 = vpack.c.b16 %v1331, %v1330
        %v1341 = vsel %vm411, %v1299, 0
        %v1344 = vsel %vm411, %v1300, 0
        %v1347 = vsel %vm411, %v1301, 0
        %v1350 = vsel %vm411, %v1302, 0
        %v1353 = vsel %vm411, %v1303, 0
        %v1356 = vsel %vm411, %v1304, 0
        %v1359 = vsel %vm411, %v1305, 0
        %1361 = vmatpush.bf16.msra.mxu0 0
        %1362 = vmatpush.bf16.msra.mxu0 0
        %1363 = vmatpush.bf16.msra.mxu0 0
        %1364 = vmatpush.bf16.msra.mxu0 0
        %1365 = vmatpush.bf16.msra.mxu0 %v1335
        %1366 = vmatpush.bf16.msra.mxu0 %v1334
        %1367 = vmatpush.bf16.msra.mxu0 %v1333
        %1368 = vmatpush.bf16.msra.mxu0 %v1332
        %1369 = vmatmul.bf16.gmra.mxu0 %v1341
        %v1370 = vpop.f32.mrf.mxu0
        %v1371 = vadd.f32 %v1315, %v1370
        %v1372 = vpop.f32.mrf.mxu0
        %v1373 = vadd.f32 %v1315, %v1372
        %1374 = vmatmul.bf16.gmra.mxu0 %v1344
        %v1375 = vpop.f32.mrf.mxu0
        %v1376 = vadd.f32 %v1315, %v1375
        %v1377 = vpop.f32.mrf.mxu0
        %v1378 = vadd.f32 %v1315, %v1377
        %1379 = vmatmul.bf16.gmra.mxu0 %v1347
        %v1380 = vpop.f32.mrf.mxu0
        %v1381 = vadd.f32 %v1315, %v1380
        %v1382 = vpop.f32.mrf.mxu0
        %v1383 = vadd.f32 %v1315, %v1382
        %1384 = vmatmul.bf16.gmra.mxu0 %v1350
        %v1385 = vpop.f32.mrf.mxu0
        %v1386 = vadd.f32 %v1315, %v1385
        %v1387 = vpop.f32.mrf.mxu0
        %v1388 = vadd.f32 %v1315, %v1387
        %1389 = vmatmul.bf16.gmra.mxu0 %v1353
        %v1390 = vpop.f32.mrf.mxu0
        %v1391 = vadd.f32 %v1315, %v1390
        %v1392 = vpop.f32.mrf.mxu0
        %v1393 = vadd.f32 %v1315, %v1392
        %1394 = vmatmul.bf16.gmra.mxu0 %v1356
        %v1395 = vpop.f32.mrf.mxu0
        %v1396 = vadd.f32 %v1315, %v1395
        %v1397 = vpop.f32.mrf.mxu0
        %v1398 = vadd.f32 %v1315, %v1397
        %1399 = vmatmul.bf16.gmra.mxu0 %v1359
        %v1400 = vpop.f32.mrf.mxu0
        %v1401 = vadd.f32 %v1315, %v1400
        %v1402 = vpop.f32.mrf.mxu0
        %1403 = vdwg.mxu0
        %v1404 = vsel %vm411, %v1371, 0.0
        %1405 = vadd.xlane.f32.xlu0 %v1404
        %v1406 = vpop.xlane.xlu0 %1405
        %v1407 = vsel %vm411, %v1373, 0.0
        %1408 = vadd.xlane.f32.xlu0 %v1407
        %v1409 = vpop.xlane.xlu0 %1408
        %v1410 = vsel %vm411, %v1376, 0.0
        %1411 = vadd.xlane.f32.xlu0 %v1410
        %v1412 = vpop.xlane.xlu0 %1411
        %v1413 = vsel %vm411, %v1378, 0.0
        %1414 = vadd.xlane.f32.xlu0 %v1413
        %v1415 = vpop.xlane.xlu0 %1414
        %v1416 = vsel %vm411, %v1381, 0.0
        %1417 = vadd.xlane.f32.xlu0 %v1416
        %v1418 = vpop.xlane.xlu0 %1417
        %v1419 = vsel %vm411, %v1383, 0.0
        %1420 = vadd.xlane.f32.xlu0 %v1419
        %v1421 = vpop.xlane.xlu0 %1420
        %v1422 = vsel %vm411, %v1386, 0.0
        %1423 = vadd.xlane.f32.xlu0 %v1422
        %v1424 = vpop.xlane.xlu0 %1423
        %v1425 = vsel %vm411, %v1388, 0.0
        %1426 = vadd.xlane.f32.xlu0 %v1425
        %v1427 = vpop.xlane.xlu0 %1426
        %v1428 = vsel %vm411, %v1391, 0.0
        %1429 = vadd.xlane.f32.xlu0 %v1428
        %v1430 = vpop.xlane.xlu0 %1429
        %v1431 = vsel %vm411, %v1393, 0.0
        %1432 = vadd.xlane.f32.xlu0 %v1431
        %v1433 = vpop.xlane.xlu0 %1432
        %v1434 = vsel %vm411, %v1396, 0.0
        %1435 = vadd.xlane.f32.xlu0 %v1434
        %v1436 = vpop.xlane.xlu0 %1435
        %v1437 = vsel %vm411, %v1398, 0.0
        %1438 = vadd.xlane.f32.xlu0 %v1437
        %v1439 = vpop.xlane.xlu0 %1438
        %v1440 = vsel %vm411, %v1401, 0.0
        %1441 = vadd.xlane.f32.xlu0 %v1440
        %v1442 = vpop.xlane.xlu0 %1441
        %v1443 = vmul.f32 %v1406, %v457
        %v1444 = vmul.f32 %v1409, %v457
        %v1445 = vmul.f32 %v1412, %v457
        %v1446 = vmul.f32 %v1415, %v457
        %v1447 = vmul.f32 %v1418, %v457
        %v1448 = vmul.f32 %v1421, %v457
        %v1449 = vmul.f32 %v1424, %v457
        %v1450 = vmul.f32 %v1427, %v457
        %v1451 = vmul.f32 %v1430, %v457
        %v1452 = vmul.f32 %v1433, %v457
        %v1453 = vmul.f32 %v1436, %v457
        %v1454 = vmul.f32 %v1439, %v457
        %v1455 = vmul.f32 %v1442, %v457
        %v1456 = vsub.f32 %v1371, %v1443
        %v1457 = vsub.f32 %v1373, %v1444
        %v1458 = vsub.f32 %v1376, %v1445
        %v1459 = vsub.f32 %v1378, %v1446
        %v1460 = vsub.f32 %v1381, %v1447
        %v1461 = vsub.f32 %v1383, %v1448
        %v1462 = vsub.f32 %v1386, %v1449
        %v1463 = vsub.f32 %v1388, %v1450
        %v1464 = vsub.f32 %v1391, %v1451
        %v1465 = vsub.f32 %v1393, %v1452
        %v1466 = vsub.f32 %v1396, %v1453
        %v1467 = vsub.f32 %v1398, %v1454
        %v1468 = vsub.f32 %v1401, %v1455
        %v1469 = vmul.f32 %v1456, %v1456
        %v1470 = vmul.f32 %v1457, %v1457
        %v1471 = vmul.f32 %v1458, %v1458
        %v1472 = vmul.f32 %v1459, %v1459
        %v1473 = vmul.f32 %v1460, %v1460
        %v1474 = vmul.f32 %v1461, %v1461
        %v1475 = vmul.f32 %v1462, %v1462
        %v1476 = vmul.f32 %v1463, %v1463
        %v1477 = vmul.f32 %v1464, %v1464
        %v1478 = vmul.f32 %v1465, %v1465
        %v1479 = vmul.f32 %v1466, %v1466
        %v1480 = vmul.f32 %v1467, %v1467
        %v1481 = vmul.f32 %v1468, %v1468
        %v1482 = vsel %vm411, %v1469, 0.0
        %1483 = vadd.xlane.f32.xlu0 %v1482
        %v1484 = vpop.xlane.xlu0 %1483
        %v1485 = vsel %vm411, %v1470, 0.0
        %1486 = vadd.xlane.f32.xlu0 %v1485
        %v1487 = vpop.xlane.xlu0 %1486
        %v1488 = vsel %vm411, %v1471, 0.0
        %1489 = vadd.xlane.f32.xlu0 %v1488
        %v1490 = vpop.xlane.xlu0 %1489
        %v1491 = vsel %vm411, %v1472, 0.0
        %1492 = vadd.xlane.f32.xlu0 %v1491
        %v1493 = vpop.xlane.xlu0 %1492
        %v1494 = vsel %vm411, %v1473, 0.0
        %1495 = vadd.xlane.f32.xlu0 %v1494
        %v1496 = vpop.xlane.xlu0 %1495
        %v1497 = vsel %vm411, %v1474, 0.0
        %1498 = vadd.xlane.f32.xlu0 %v1497
        %v1499 = vpop.xlane.xlu0 %1498
        %v1500 = vsel %vm411, %v1475, 0.0
        %1501 = vadd.xlane.f32.xlu0 %v1500
        %v1502 = vpop.xlane.xlu0 %1501
        %v1503 = vsel %vm411, %v1476, 0.0
        %1504 = vadd.xlane.f32.xlu0 %v1503
        %v1505 = vpop.xlane.xlu0 %1504
        %v1506 = vsel %vm411, %v1477, 0.0
        %1507 = vadd.xlane.f32.xlu0 %v1506
        %v1508 = vpop.xlane.xlu0 %1507
        %v1509 = vsel %vm411, %v1478, 0.0
        %1510 = vadd.xlane.f32.xlu0 %v1509
        %v1511 = vpop.xlane.xlu0 %1510
        %v1512 = vsel %vm411, %v1479, 0.0
        %1513 = vadd.xlane.f32.xlu0 %v1512
        %v1514 = vpop.xlane.xlu0 %1513
        %v1515 = vsel %vm411, %v1480, 0.0
        %1516 = vadd.xlane.f32.xlu0 %v1515
        %v1517 = vpop.xlane.xlu0 %1516
        %v1518 = vsel %vm411, %v1481, 0.0
        %1519 = vadd.xlane.f32.xlu0 %v1518
        %v1520 = vpop.xlane.xlu0 %1519
        %v1521 = vmul.f32 %v1484, %v457
        %v1522 = vmul.f32 %v1487, %v457
        %v1523 = vmul.f32 %v1490, %v457
        %v1524 = vmul.f32 %v1493, %v457
        %v1525 = vmul.f32 %v1496, %v457
        %v1526 = vmul.f32 %v1499, %v457
        %v1527 = vmul.f32 %v1502, %v457
        %v1528 = vmul.f32 %v1505, %v457
        %v1529 = vmul.f32 %v1508, %v457
        %v1530 = vmul.f32 %v1511, %v457
        %v1531 = vmul.f32 %v1514, %v457
        %v1532 = vmul.f32 %v1517, %v457
        %v1533 = vmul.f32 %v1520, %v457
        %v1534 = vadd.f32 %v1521, 1e-05
        %v1535 = vadd.f32 %v1522, 1e-05
        %v1536 = vadd.f32 %v1523, 1e-05
        %v1537 = vadd.f32 %v1524, 1e-05
        %v1538 = vadd.f32 %v1525, 1e-05
        %v1539 = vadd.f32 %v1526, 1e-05
        %v1540 = vadd.f32 %v1527, 1e-05
        %v1541 = vadd.f32 %v1528, 1e-05
        %v1542 = vadd.f32 %v1529, 1e-05
        %v1543 = vadd.f32 %v1530, 1e-05
        %v1544 = vadd.f32 %v1531, 1e-05
        %v1545 = vadd.f32 %v1532, 1e-05
        %v1546 = vadd.f32 %v1533, 1e-05
        %v1547 = vrsqrt.pop %v1534
        %v1548 = vmul.f32 %v1547, %v1534
        %v1549 = vmul.f32 %v1548, %v1547
        %v1550 = vmul.f32 0.5, %v1549
        %v1551 = vsub.f32 1.5, %v1550
        %v1552 = vmul.f32 %v1547, %v1551
        %vm1553 = vweird.f32 %v1534
        %vm1554 = vweird.f32 %v1547
        %vm1555 = vmor %vm1553, %vm1554
        %v1556 = vsel %vm1555, %v1547, %v1552
        %v1557 = vrsqrt.pop %v1535
        %v1558 = vmul.f32 %v1557, %v1535
        %v1559 = vmul.f32 %v1558, %v1557
        %v1560 = vmul.f32 0.5, %v1559
        %v1561 = vsub.f32 1.5, %v1560
        %v1562 = vmul.f32 %v1557, %v1561
        %vm1563 = vweird.f32 %v1535
        %vm1564 = vweird.f32 %v1557
        %vm1565 = vmor %vm1563, %vm1564
        %v1566 = vsel %vm1565, %v1557, %v1562
        %v1567 = vrsqrt.pop %v1536
        %v1568 = vmul.f32 %v1567, %v1536
        %v1569 = vmul.f32 %v1568, %v1567
        %v1570 = vmul.f32 0.5, %v1569
        %v1571 = vsub.f32 1.5, %v1570
        %v1572 = vmul.f32 %v1567, %v1571
        %vm1573 = vweird.f32 %v1536
        %vm1574 = vweird.f32 %v1567
        %vm1575 = vmor %vm1573, %vm1574
        %v1576 = vsel %vm1575, %v1567, %v1572
        %v1577 = vrsqrt.pop %v1537
        %v1578 = vmul.f32 %v1577, %v1537
        %v1579 = vmul.f32 %v1578, %v1577
        %v1580 = vmul.f32 0.5, %v1579
        %v1581 = vsub.f32 1.5, %v1580
        %v1582 = vmul.f32 %v1577, %v1581
        %vm1583 = vweird.f32 %v1537
        %vm1584 = vweird.f32 %v1577
        %vm1585 = vmor %vm1583, %vm1584
        %v1586 = vsel %vm1585, %v1577, %v1582
        %v1587 = vrsqrt.pop %v1538
        %v1588 = vmul.f32 %v1587, %v1538
        %v1589 = vmul.f32 %v1588, %v1587
        %v1590 = vmul.f32 0.5, %v1589
        %v1591 = vsub.f32 1.5, %v1590
        %v1592 = vmul.f32 %v1587, %v1591
        %vm1593 = vweird.f32 %v1538
        %vm1594 = vweird.f32 %v1587
        %vm1595 = vmor %vm1593, %vm1594
        %v1596 = vsel %vm1595, %v1587, %v1592
        %v1597 = vrsqrt.pop %v1539
        %v1598 = vmul.f32 %v1597, %v1539
        %v1599 = vmul.f32 %v1598, %v1597
        %v1600 = vmul.f32 0.5, %v1599
        %v1601 = vsub.f32 1.5, %v1600
        %v1602 = vmul.f32 %v1597, %v1601
        %vm1603 = vweird.f32 %v1539
        %vm1604 = vweird.f32 %v1597
        %vm1605 = vmor %vm1603, %vm1604
        %v1606 = vsel %vm1605, %v1597, %v1602
        %v1607 = vrsqrt.pop %v1540
        %v1608 = vmul.f32 %v1607, %v1540
        %v1609 = vmul.f32 %v1608, %v1607
        %v1610 = vmul.f32 0.5, %v1609
        %v1611 = vsub.f32 1.5, %v1610
        %v1612 = vmul.f32 %v1607, %v1611
        %vm1613 = vweird.f32 %v1540
        %vm1614 = vweird.f32 %v1607
        %vm1615 = vmor %vm1613, %vm1614
        %v1616 = vsel %vm1615, %v1607, %v1612
        %v1617 = vrsqrt.pop %v1541
        %v1618 = vmul.f32 %v1617, %v1541
        %v1619 = vmul.f32 %v1618, %v1617
        %v1620 = vmul.f32 0.5, %v1619
        %v1621 = vsub.f32 1.5, %v1620
        %v1622 = vmul.f32 %v1617, %v1621
        %vm1623 = vweird.f32 %v1541
        %vm1624 = vweird.f32 %v1617
        %vm1625 = vmor %vm1623, %vm1624
        %v1626 = vsel %vm1625, %v1617, %v1622
        %v1627 = vrsqrt.pop %v1542
        %v1628 = vmul.f32 %v1627, %v1542
        %v1629 = vmul.f32 %v1628, %v1627
        %v1630 = vmul.f32 0.5, %v1629
        %v1631 = vsub.f32 1.5, %v1630
        %v1632 = vmul.f32 %v1627, %v1631
        %vm1633 = vweird.f32 %v1542
        %vm1634 = vweird.f32 %v1627
        %vm1635 = vmor %vm1633, %vm1634
        %v1636 = vsel %vm1635, %v1627, %v1632
        %v1637 = vrsqrt.pop %v1543
        %v1638 = vmul.f32 %v1637, %v1543
        %v1639 = vmul.f32 %v1638, %v1637
        %v1640 = vmul.f32 0.5, %v1639
        %v1641 = vsub.f32 1.5, %v1640
        %v1642 = vmul.f32 %v1637, %v1641
        %vm1643 = vweird.f32 %v1543
        %vm1644 = vweird.f32 %v1637
        %vm1645 = vmor %vm1643, %vm1644
        %v1646 = vsel %vm1645, %v1637, %v1642
        %v1647 = vrsqrt.pop %v1544
        %v1648 = vmul.f32 %v1647, %v1544
        %v1649 = vmul.f32 %v1648, %v1647
        %v1650 = vmul.f32 0.5, %v1649
        %v1651 = vsub.f32 1.5, %v1650
        %v1652 = vmul.f32 %v1647, %v1651
        %vm1653 = vweird.f32 %v1544
        %vm1654 = vweird.f32 %v1647
        %vm1655 = vmor %vm1653, %vm1654
        %v1656 = vsel %vm1655, %v1647, %v1652
        %v1657 = vrsqrt.pop %v1545
        %v1658 = vmul.f32 %v1657, %v1545
        %v1659 = vmul.f32 %v1658, %v1657
        %v1660 = vmul.f32 0.5, %v1659
        %v1661 = vsub.f32 1.5, %v1660
        %v1662 = vmul.f32 %v1657, %v1661
        %vm1663 = vweird.f32 %v1545
        %vm1664 = vweird.f32 %v1657
        %vm1665 = vmor %vm1663, %vm1664
        %v1666 = vsel %vm1665, %v1657, %v1662
        %v1667 = vrsqrt.pop %v1546
        %v1668 = vmul.f32 %v1667, %v1546
        %v1669 = vmul.f32 %v1668, %v1667
        %v1670 = vmul.f32 0.5, %v1669
        %v1671 = vsub.f32 1.5, %v1670
        %v1672 = vmul.f32 %v1667, %v1671
        %vm1673 = vweird.f32 %v1546
        %vm1674 = vweird.f32 %v1667
        %vm1675 = vmor %vm1673, %vm1674
        %v1676 = vsel %vm1675, %v1667, %v1672
        %v1677 = vmul.f32 %v1456, %v1556
        %v1678 = vmul.f32 %v1457, %v1566
        %v1679 = vmul.f32 %v1458, %v1576
        %v1680 = vmul.f32 %v1459, %v1586
        %v1681 = vmul.f32 %v1460, %v1596
        %v1682 = vmul.f32 %v1461, %v1606
        %v1683 = vmul.f32 %v1462, %v1616
        %v1684 = vmul.f32 %v1463, %v1626
        %v1685 = vmul.f32 %v1464, %v1636
        %v1686 = vmul.f32 %v1465, %v1646
        %v1687 = vmul.f32 %v1466, %v1656
        %v1688 = vmul.f32 %v1467, %v1666
        %v1689 = vmul.f32 %v1468, %v1676
        %v1690 = vld [vmem:[%s7 + $0x7] sm:$0x1]
        %v1691 = vperm.slane %v1690, 0
        %v1692 = vmul.f32 %v1677, %v1691
        %v1693 = vmul.f32 %v1678, %v1691
        %v1694 = vmul.f32 %v1679, %v1691
        %v1695 = vmul.f32 %v1680, %v1691
        %v1696 = vmul.f32 %v1681, %v1691
        %v1697 = vmul.f32 %v1682, %v1691
        %v1698 = vmul.f32 %v1683, %v1691
        %v1699 = vmul.f32 %v1684, %v1691
        %v1700 = vmul.f32 %v1685, %v1691
        %v1701 = vmul.f32 %v1686, %v1691
        %v1702 = vmul.f32 %v1687, %v1691
        %v1703 = vmul.f32 %v1688, %v1691
        %v1704 = vmul.f32 %v1689, %v1691
        %v1705 = vld [vmem:[%s7 + $0x8] sm:$0x1]
        %v1706 = vperm.slane %v1705, 0
        %v1707 = vadd.f32 %v1692, %v1706
        %v1708 = vadd.f32 %v1693, %v1706
        %v1709 = vadd.f32 %v1694, %v1706
        %v1710 = vadd.f32 %v1695, %v1706
        %v1711 = vadd.f32 %v1696, %v1706
        %v1712 = vadd.f32 %v1697, %v1706
        %v1713 = vadd.f32 %v1698, %v1706
        %v1714 = vadd.f32 %v1699, %v1706
        %v1715 = vadd.f32 %v1700, %v1706
        %v1716 = vadd.f32 %v1701, %v1706
        %v1717 = vadd.f32 %v1702, %v1706
        %v1718 = vadd.f32 %v1703, %v1706
        %v1719 = vadd.f32 %v1704, %v1706
        %vm1720 = vcmp.ge.f32.partialorder %v1707, 0.0
        %vm1721 = vcmp.ge.f32.partialorder %v1708, 0.0
        %vm1722 = vcmp.ge.f32.partialorder %v1709, 0.0
        %vm1723 = vcmp.ge.f32.partialorder %v1710, 0.0
        %vm1724 = vcmp.ge.f32.partialorder %v1711, 0.0
        %vm1725 = vcmp.ge.f32.partialorder %v1712, 0.0
        %vm1726 = vcmp.ge.f32.partialorder %v1713, 0.0
        %vm1727 = vcmp.ge.f32.partialorder %v1714, 0.0
        %vm1728 = vcmp.ge.f32.partialorder %v1715, 0.0
        %vm1729 = vcmp.ge.f32.partialorder %v1716, 0.0
        %vm1730 = vcmp.ge.f32.partialorder %v1717, 0.0
        %vm1731 = vcmp.ge.f32.partialorder %v1718, 0.0
        %vm1732 = vcmp.ge.f32.partialorder %v1719, 0.0
        %v1733 = vmul.f32 %v1707, 0.01
        %v1734 = vmul.f32 %v1708, 0.01
        %v1735 = vmul.f32 %v1709, 0.01
        %v1736 = vmul.f32 %v1710, 0.01
        %v1737 = vmul.f32 %v1711, 0.01
        %v1738 = vmul.f32 %v1712, 0.01
        %v1739 = vmul.f32 %v1713, 0.01
        %v1740 = vmul.f32 %v1714, 0.01
        %v1741 = vmul.f32 %v1715, 0.01
        %v1742 = vmul.f32 %v1716, 0.01
        %v1743 = vmul.f32 %v1717, 0.01
        %v1744 = vmul.f32 %v1718, 0.01
        %v1745 = vmul.f32 %v1719, 0.01
        %v1746 = vsel %vm1720, %v1707, %v1733
        %v1747 = vsel %vm1721, %v1708, %v1734
        %v1748 = vsel %vm1722, %v1709, %v1735
        %v1749 = vsel %vm1723, %v1710, %v1736
        %v1750 = vsel %vm1724, %v1711, %v1737
        %v1751 = vsel %vm1725, %v1712, %v1738
        %v1752 = vsel %vm1726, %v1713, %v1739
        %v1753 = vsel %vm1727, %v1714, %v1740
        %v1754 = vsel %vm1728, %v1715, %v1741
        %v1755 = vsel %vm1729, %v1716, %v1742
        %v1756 = vsel %vm1730, %v1717, %v1743
        %v1757 = vsel %vm1731, %v1718, %v1744
        %v1758 = vsel %vm1732, %v1719, %v1745
        %v1759 = vpack.c.bf16 %v1747, %v1746
        %v1760 = vpack.c.bf16 %v1749, %v1748
        %v1761 = vpack.c.bf16 %v1751, %v1750
        %v1762 = vpack.c.bf16 %v1753, %v1752
        %v1763 = vpack.c.bf16 %v1755, %v1754
        %v1764 = vpack.c.bf16 %v1757, %v1756
        %v1765 = vpack.c.bf16 %v1758, %v1758
        %v1766 = vld [vmem:[%s4] sm:$0xf]
        %v1767 = vld [vmem:[%s4 + $0x4] sm:$0xf]
        %v1768 = vld [vmem:[%s4 + $0x8] sm:$0xf]
        %v1769 = vld [vmem:[%s4 + $0xc] sm:$0xf]
        %v1770 = vld [vmem:[%s4 + $0x10] sm:$0xf]
        %v1771 = vld [vmem:[%s4 + $0x14] sm:$0xf]
        %v1772 = vld [vmem:[%s4 + $0x18] sm:$0xf]
        %v1773 = vld [vmem:[%s4 + $0x1c] sm:$0xf]
        %v1774 = vld [vmem:[%s7 + $0x9] sm:$0x1]
        %v1775 = vperm.slane %v1774, 0
        %v1784 = vunpack.c.l.b16 %v1766
        %v1785 = vunpack.c.l.b16 %v1767
        %v1786 = vunpack.c.l.b16 %v1768
        %v1787 = vunpack.c.l.b16 %v1769
        %v1788 = vunpack.c.l.b16 %v1770
        %v1789 = vunpack.c.l.b16 %v1771
        %v1790 = vunpack.c.l.b16 %v1772
        %v1791 = vunpack.c.l.b16 %v1773
        %v1792 = vpack.c.b16 %v1785, %v1784
        %v1793 = vpack.c.b16 %v1787, %v1786
        %v1794 = vpack.c.b16 %v1789, %v1788
        %v1795 = vpack.c.b16 %v1791, %v1790
        %v1801 = vsel %vm411, %v1759, 0
        %v1804 = vsel %vm411, %v1760, 0
        %v1807 = vsel %vm411, %v1761, 0
        %v1810 = vsel %vm411, %v1762, 0
        %v1813 = vsel %vm411, %v1763, 0
        %v1816 = vsel %vm411, %v1764, 0
        %v1819 = vsel %vm411, %v1765, 0
        %1821 = vmatpush.bf16.msra.mxu0 0
        %1822 = vmatpush.bf16.msra.mxu0 0
        %1823 = vmatpush.bf16.msra.mxu0 0
        %1824 = vmatpush.bf16.msra.mxu0 0
        %1825 = vmatpush.bf16.msra.mxu0 %v1795
        %1826 = vmatpush.bf16.msra.mxu0 %v1794
        %1827 = vmatpush.bf16.msra.mxu0 %v1793
        %1828 = vmatpush.bf16.msra.mxu0 %v1792
        %1829 = vmatmul.bf16.gmra.mxu0 %v1801
        %v1830 = vpop.f32.mrf.mxu0
        %v1831 = vadd.f32 %v1775, %v1830
        %v1832 = vpop.f32.mrf.mxu0
        %v1833 = vadd.f32 %v1775, %v1832
        %1834 = vmatmul.bf16.gmra.mxu0 %v1804
        %v1835 = vpop.f32.mrf.mxu0
        %v1836 = vadd.f32 %v1775, %v1835
        %v1837 = vpop.f32.mrf.mxu0
        %v1838 = vadd.f32 %v1775, %v1837
        %1839 = vmatmul.bf16.gmra.mxu0 %v1807
        %v1840 = vpop.f32.mrf.mxu0
        %v1841 = vadd.f32 %v1775, %v1840
        %v1842 = vpop.f32.mrf.mxu0
        %v1843 = vadd.f32 %v1775, %v1842
        %1844 = vmatmul.bf16.gmra.mxu0 %v1810
        %v1845 = vpop.f32.mrf.mxu0
        %v1846 = vadd.f32 %v1775, %v1845
        %v1847 = vpop.f32.mrf.mxu0
        %v1848 = vadd.f32 %v1775, %v1847
        %1849 = vmatmul.bf16.gmra.mxu0 %v1813
        %v1850 = vpop.f32.mrf.mxu0
        %v1851 = vadd.f32 %v1775, %v1850
        %v1852 = vpop.f32.mrf.mxu0
        %v1853 = vadd.f32 %v1775, %v1852
        %1854 = vmatmul.bf16.gmra.mxu0 %v1816
        %v1855 = vpop.f32.mrf.mxu0
        %v1856 = vadd.f32 %v1775, %v1855
        %v1857 = vpop.f32.mrf.mxu0
        %v1858 = vadd.f32 %v1775, %v1857
        %1859 = vmatmul.bf16.gmra.mxu0 %v1819
        %v1860 = vpop.f32.mrf.mxu0
        %v1861 = vadd.f32 %v1775, %v1860
        %v1862 = vpop.f32.mrf.mxu0
        %1863 = vdwg.mxu0
        %v1864 = vsel %vm411, %v1831, 0.0
        %1865 = vadd.xlane.f32.xlu0 %v1864
        %v1866 = vpop.xlane.xlu0 %1865
        %v1867 = vsel %vm411, %v1833, 0.0
        %1868 = vadd.xlane.f32.xlu0 %v1867
        %v1869 = vpop.xlane.xlu0 %1868
        %v1870 = vsel %vm411, %v1836, 0.0
        %1871 = vadd.xlane.f32.xlu0 %v1870
        %v1872 = vpop.xlane.xlu0 %1871
        %v1873 = vsel %vm411, %v1838, 0.0
        %1874 = vadd.xlane.f32.xlu0 %v1873
        %v1875 = vpop.xlane.xlu0 %1874
        %v1876 = vsel %vm411, %v1841, 0.0
        %1877 = vadd.xlane.f32.xlu0 %v1876
        %v1878 = vpop.xlane.xlu0 %1877
        %v1879 = vsel %vm411, %v1843, 0.0
        %1880 = vadd.xlane.f32.xlu0 %v1879
        %v1881 = vpop.xlane.xlu0 %1880
        %v1882 = vsel %vm411, %v1846, 0.0
        %1883 = vadd.xlane.f32.xlu0 %v1882
        %v1884 = vpop.xlane.xlu0 %1883
        %v1885 = vsel %vm411, %v1848, 0.0
        %1886 = vadd.xlane.f32.xlu0 %v1885
        %v1887 = vpop.xlane.xlu0 %1886
        %v1888 = vsel %vm411, %v1851, 0.0
        %1889 = vadd.xlane.f32.xlu0 %v1888
        %v1890 = vpop.xlane.xlu0 %1889
        %v1891 = vsel %vm411, %v1853, 0.0
        %1892 = vadd.xlane.f32.xlu0 %v1891
        %v1893 = vpop.xlane.xlu0 %1892
        %v1894 = vsel %vm411, %v1856, 0.0
        %1895 = vadd.xlane.f32.xlu0 %v1894
        %v1896 = vpop.xlane.xlu0 %1895
        %v1897 = vsel %vm411, %v1858, 0.0
        %1898 = vadd.xlane.f32.xlu0 %v1897
        %v1899 = vpop.xlane.xlu0 %1898
        %v1900 = vsel %vm411, %v1861, 0.0
        %1901 = vadd.xlane.f32.xlu0 %v1900
        %v1902 = vpop.xlane.xlu0 %1901
        %v1903 = vmul.f32 %v1866, %v457
        %v1904 = vmul.f32 %v1869, %v457
        %v1905 = vmul.f32 %v1872, %v457
        %v1906 = vmul.f32 %v1875, %v457
        %v1907 = vmul.f32 %v1878, %v457
        %v1908 = vmul.f32 %v1881, %v457
        %v1909 = vmul.f32 %v1884, %v457
        %v1910 = vmul.f32 %v1887, %v457
        %v1911 = vmul.f32 %v1890, %v457
        %v1912 = vmul.f32 %v1893, %v457
        %v1913 = vmul.f32 %v1896, %v457
        %v1914 = vmul.f32 %v1899, %v457
        %v1915 = vmul.f32 %v1902, %v457
        %v1916 = vsub.f32 %v1831, %v1903
        %v1917 = vsub.f32 %v1833, %v1904
        %v1918 = vsub.f32 %v1836, %v1905
        %v1919 = vsub.f32 %v1838, %v1906
        %v1920 = vsub.f32 %v1841, %v1907
        %v1921 = vsub.f32 %v1843, %v1908
        %v1922 = vsub.f32 %v1846, %v1909
        %v1923 = vsub.f32 %v1848, %v1910
        %v1924 = vsub.f32 %v1851, %v1911
        %v1925 = vsub.f32 %v1853, %v1912
        %v1926 = vsub.f32 %v1856, %v1913
        %v1927 = vsub.f32 %v1858, %v1914
        %v1928 = vsub.f32 %v1861, %v1915
        %v1929 = vmul.f32 %v1916, %v1916
        %v1930 = vmul.f32 %v1917, %v1917
        %v1931 = vmul.f32 %v1918, %v1918
        %v1932 = vmul.f32 %v1919, %v1919
        %v1933 = vmul.f32 %v1920, %v1920
        %v1934 = vmul.f32 %v1921, %v1921
        %v1935 = vmul.f32 %v1922, %v1922
        %v1936 = vmul.f32 %v1923, %v1923
        %v1937 = vmul.f32 %v1924, %v1924
        %v1938 = vmul.f32 %v1925, %v1925
        %v1939 = vmul.f32 %v1926, %v1926
        %v1940 = vmul.f32 %v1927, %v1927
        %v1941 = vmul.f32 %v1928, %v1928
        %v1942 = vsel %vm411, %v1929, 0.0
        %1943 = vadd.xlane.f32.xlu0 %v1942
        %v1944 = vpop.xlane.xlu0 %1943
        %v1945 = vsel %vm411, %v1930, 0.0
        %1946 = vadd.xlane.f32.xlu0 %v1945
        %v1947 = vpop.xlane.xlu0 %1946
        %v1948 = vsel %vm411, %v1931, 0.0
        %1949 = vadd.xlane.f32.xlu0 %v1948
        %v1950 = vpop.xlane.xlu0 %1949
        %v1951 = vsel %vm411, %v1932, 0.0
        %1952 = vadd.xlane.f32.xlu0 %v1951
        %v1953 = vpop.xlane.xlu0 %1952
        %v1954 = vsel %vm411, %v1933, 0.0
        %1955 = vadd.xlane.f32.xlu0 %v1954
        %v1956 = vpop.xlane.xlu0 %1955
        %v1957 = vsel %vm411, %v1934, 0.0
        %1958 = vadd.xlane.f32.xlu0 %v1957
        %v1959 = vpop.xlane.xlu0 %1958
        %v1960 = vsel %vm411, %v1935, 0.0
        %1961 = vadd.xlane.f32.xlu0 %v1960
        %v1962 = vpop.xlane.xlu0 %1961
        %v1963 = vsel %vm411, %v1936, 0.0
        %1964 = vadd.xlane.f32.xlu0 %v1963
        %v1965 = vpop.xlane.xlu0 %1964
        %v1966 = vsel %vm411, %v1937, 0.0
        %1967 = vadd.xlane.f32.xlu0 %v1966
        %v1968 = vpop.xlane.xlu0 %1967
        %v1969 = vsel %vm411, %v1938, 0.0
        %1970 = vadd.xlane.f32.xlu0 %v1969
        %v1971 = vpop.xlane.xlu0 %1970
        %v1972 = vsel %vm411, %v1939, 0.0
        %1973 = vadd.xlane.f32.xlu0 %v1972
        %v1974 = vpop.xlane.xlu0 %1973
        %v1975 = vsel %vm411, %v1940, 0.0
        %1976 = vadd.xlane.f32.xlu0 %v1975
        %v1977 = vpop.xlane.xlu0 %1976
        %v1978 = vsel %vm411, %v1941, 0.0
        %1979 = vadd.xlane.f32.xlu0 %v1978
        %v1980 = vpop.xlane.xlu0 %1979
        %v1981 = vmul.f32 %v1944, %v457
        %v1982 = vmul.f32 %v1947, %v457
        %v1983 = vmul.f32 %v1950, %v457
        %v1984 = vmul.f32 %v1953, %v457
        %v1985 = vmul.f32 %v1956, %v457
        %v1986 = vmul.f32 %v1959, %v457
        %v1987 = vmul.f32 %v1962, %v457
        %v1988 = vmul.f32 %v1965, %v457
        %v1989 = vmul.f32 %v1968, %v457
        %v1990 = vmul.f32 %v1971, %v457
        %v1991 = vmul.f32 %v1974, %v457
        %v1992 = vmul.f32 %v1977, %v457
        %v1993 = vmul.f32 %v1980, %v457
        %v1994 = vadd.f32 %v1981, 1e-05
        %v1995 = vadd.f32 %v1982, 1e-05
        %v1996 = vadd.f32 %v1983, 1e-05
        %v1997 = vadd.f32 %v1984, 1e-05
        %v1998 = vadd.f32 %v1985, 1e-05
        %v1999 = vadd.f32 %v1986, 1e-05
        %v2000 = vadd.f32 %v1987, 1e-05
        %v2001 = vadd.f32 %v1988, 1e-05
        %v2002 = vadd.f32 %v1989, 1e-05
        %v2003 = vadd.f32 %v1990, 1e-05
        %v2004 = vadd.f32 %v1991, 1e-05
        %v2005 = vadd.f32 %v1992, 1e-05
        %v2006 = vadd.f32 %v1993, 1e-05
        %v2007 = vrsqrt.pop %v1994
        %v2008 = vmul.f32 %v2007, %v1994
        %v2009 = vmul.f32 %v2008, %v2007
        %v2010 = vmul.f32 0.5, %v2009
        %v2011 = vsub.f32 1.5, %v2010
        %v2012 = vmul.f32 %v2007, %v2011
        %vm2013 = vweird.f32 %v1994
        %vm2014 = vweird.f32 %v2007
        %vm2015 = vmor %vm2013, %vm2014
        %v2016 = vsel %vm2015, %v2007, %v2012
        %v2017 = vrsqrt.pop %v1995
        %v2018 = vmul.f32 %v2017, %v1995
        %v2019 = vmul.f32 %v2018, %v2017
        %v2020 = vmul.f32 0.5, %v2019
        %v2021 = vsub.f32 1.5, %v2020
        %v2022 = vmul.f32 %v2017, %v2021
        %vm2023 = vweird.f32 %v1995
        %vm2024 = vweird.f32 %v2017
        %vm2025 = vmor %vm2023, %vm2024
        %v2026 = vsel %vm2025, %v2017, %v2022
        %v2027 = vrsqrt.pop %v1996
        %v2028 = vmul.f32 %v2027, %v1996
        %v2029 = vmul.f32 %v2028, %v2027
        %v2030 = vmul.f32 0.5, %v2029
        %v2031 = vsub.f32 1.5, %v2030
        %v2032 = vmul.f32 %v2027, %v2031
        %vm2033 = vweird.f32 %v1996
        %vm2034 = vweird.f32 %v2027
        %vm2035 = vmor %vm2033, %vm2034
        %v2036 = vsel %vm2035, %v2027, %v2032
        %v2037 = vrsqrt.pop %v1997
        %v2038 = vmul.f32 %v2037, %v1997
        %v2039 = vmul.f32 %v2038, %v2037
        %v2040 = vmul.f32 0.5, %v2039
        %v2041 = vsub.f32 1.5, %v2040
        %v2042 = vmul.f32 %v2037, %v2041
        %vm2043 = vweird.f32 %v1997
        %vm2044 = vweird.f32 %v2037
        %vm2045 = vmor %vm2043, %vm2044
        %v2046 = vsel %vm2045, %v2037, %v2042
        %v2047 = vrsqrt.pop %v1998
        %v2048 = vmul.f32 %v2047, %v1998
        %v2049 = vmul.f32 %v2048, %v2047
        %v2050 = vmul.f32 0.5, %v2049
        %v2051 = vsub.f32 1.5, %v2050
        %v2052 = vmul.f32 %v2047, %v2051
        %vm2053 = vweird.f32 %v1998
        %vm2054 = vweird.f32 %v2047
        %vm2055 = vmor %vm2053, %vm2054
        %v2056 = vsel %vm2055, %v2047, %v2052
        %v2057 = vrsqrt.pop %v1999
        %v2058 = vmul.f32 %v2057, %v1999
        %v2059 = vmul.f32 %v2058, %v2057
        %v2060 = vmul.f32 0.5, %v2059
        %v2061 = vsub.f32 1.5, %v2060
        %v2062 = vmul.f32 %v2057, %v2061
        %vm2063 = vweird.f32 %v1999
        %vm2064 = vweird.f32 %v2057
        %vm2065 = vmor %vm2063, %vm2064
        %v2066 = vsel %vm2065, %v2057, %v2062
        %v2067 = vrsqrt.pop %v2000
        %v2068 = vmul.f32 %v2067, %v2000
        %v2069 = vmul.f32 %v2068, %v2067
        %v2070 = vmul.f32 0.5, %v2069
        %v2071 = vsub.f32 1.5, %v2070
        %v2072 = vmul.f32 %v2067, %v2071
        %vm2073 = vweird.f32 %v2000
        %vm2074 = vweird.f32 %v2067
        %vm2075 = vmor %vm2073, %vm2074
        %v2076 = vsel %vm2075, %v2067, %v2072
        %v2077 = vrsqrt.pop %v2001
        %v2078 = vmul.f32 %v2077, %v2001
        %v2079 = vmul.f32 %v2078, %v2077
        %v2080 = vmul.f32 0.5, %v2079
        %v2081 = vsub.f32 1.5, %v2080
        %v2082 = vmul.f32 %v2077, %v2081
        %vm2083 = vweird.f32 %v2001
        %vm2084 = vweird.f32 %v2077
        %vm2085 = vmor %vm2083, %vm2084
        %v2086 = vsel %vm2085, %v2077, %v2082
        %v2087 = vrsqrt.pop %v2002
        %v2088 = vmul.f32 %v2087, %v2002
        %v2089 = vmul.f32 %v2088, %v2087
        %v2090 = vmul.f32 0.5, %v2089
        %v2091 = vsub.f32 1.5, %v2090
        %v2092 = vmul.f32 %v2087, %v2091
        %vm2093 = vweird.f32 %v2002
        %vm2094 = vweird.f32 %v2087
        %vm2095 = vmor %vm2093, %vm2094
        %v2096 = vsel %vm2095, %v2087, %v2092
        %v2097 = vrsqrt.pop %v2003
        %v2098 = vmul.f32 %v2097, %v2003
        %v2099 = vmul.f32 %v2098, %v2097
        %v2100 = vmul.f32 0.5, %v2099
        %v2101 = vsub.f32 1.5, %v2100
        %v2102 = vmul.f32 %v2097, %v2101
        %vm2103 = vweird.f32 %v2003
        %vm2104 = vweird.f32 %v2097
        %vm2105 = vmor %vm2103, %vm2104
        %v2106 = vsel %vm2105, %v2097, %v2102
        %v2107 = vrsqrt.pop %v2004
        %v2108 = vmul.f32 %v2107, %v2004
        %v2109 = vmul.f32 %v2108, %v2107
        %v2110 = vmul.f32 0.5, %v2109
        %v2111 = vsub.f32 1.5, %v2110
        %v2112 = vmul.f32 %v2107, %v2111
        %vm2113 = vweird.f32 %v2004
        %vm2114 = vweird.f32 %v2107
        %vm2115 = vmor %vm2113, %vm2114
        %v2116 = vsel %vm2115, %v2107, %v2112
        %v2117 = vrsqrt.pop %v2005
        %v2118 = vmul.f32 %v2117, %v2005
        %v2119 = vmul.f32 %v2118, %v2117
        %v2120 = vmul.f32 0.5, %v2119
        %v2121 = vsub.f32 1.5, %v2120
        %v2122 = vmul.f32 %v2117, %v2121
        %vm2123 = vweird.f32 %v2005
        %vm2124 = vweird.f32 %v2117
        %vm2125 = vmor %vm2123, %vm2124
        %v2126 = vsel %vm2125, %v2117, %v2122
        %v2127 = vrsqrt.pop %v2006
        %v2128 = vmul.f32 %v2127, %v2006
        %v2129 = vmul.f32 %v2128, %v2127
        %v2130 = vmul.f32 0.5, %v2129
        %v2131 = vsub.f32 1.5, %v2130
        %v2132 = vmul.f32 %v2127, %v2131
        %vm2133 = vweird.f32 %v2006
        %vm2134 = vweird.f32 %v2127
        %vm2135 = vmor %vm2133, %vm2134
        %v2136 = vsel %vm2135, %v2127, %v2132
        %v2137 = vmul.f32 %v1916, %v2016
        %v2138 = vmul.f32 %v1917, %v2026
        %v2139 = vmul.f32 %v1918, %v2036
        %v2140 = vmul.f32 %v1919, %v2046
        %v2141 = vmul.f32 %v1920, %v2056
        %v2142 = vmul.f32 %v1921, %v2066
        %v2143 = vmul.f32 %v1922, %v2076
        %v2144 = vmul.f32 %v1923, %v2086
        %v2145 = vmul.f32 %v1924, %v2096
        %v2146 = vmul.f32 %v1925, %v2106
        %v2147 = vmul.f32 %v1926, %v2116
        %v2148 = vmul.f32 %v1927, %v2126
        %v2149 = vmul.f32 %v1928, %v2136
        %v2150 = vld [vmem:[%s7 + $0xa] sm:$0x1]
        %v2151 = vperm.slane %v2150, 0
        %v2152 = vmul.f32 %v2137, %v2151
        %v2153 = vmul.f32 %v2138, %v2151
        %v2154 = vmul.f32 %v2139, %v2151
        %v2155 = vmul.f32 %v2140, %v2151
        %v2156 = vmul.f32 %v2141, %v2151
        %v2157 = vmul.f32 %v2142, %v2151
        %v2158 = vmul.f32 %v2143, %v2151
        %v2159 = vmul.f32 %v2144, %v2151
        %v2160 = vmul.f32 %v2145, %v2151
        %v2161 = vmul.f32 %v2146, %v2151
        %v2162 = vmul.f32 %v2147, %v2151
        %v2163 = vmul.f32 %v2148, %v2151
        %v2164 = vmul.f32 %v2149, %v2151
        %v2165 = vld [vmem:[%s7 + $0xb] sm:$0x1]
        %v2166 = vperm.slane %v2165, 0
        %v2167 = vadd.f32 %v2152, %v2166
        %v2168 = vadd.f32 %v2153, %v2166
        %v2169 = vadd.f32 %v2154, %v2166
        %v2170 = vadd.f32 %v2155, %v2166
        %v2171 = vadd.f32 %v2156, %v2166
        %v2172 = vadd.f32 %v2157, %v2166
        %v2173 = vadd.f32 %v2158, %v2166
        %v2174 = vadd.f32 %v2159, %v2166
        %v2175 = vadd.f32 %v2160, %v2166
        %v2176 = vadd.f32 %v2161, %v2166
        %v2177 = vadd.f32 %v2162, %v2166
        %v2178 = vadd.f32 %v2163, %v2166
        %v2179 = vadd.f32 %v2164, %v2166
        %vm2180 = vcmp.ge.f32.partialorder %v2167, 0.0
        %vm2181 = vcmp.ge.f32.partialorder %v2168, 0.0
        %vm2182 = vcmp.ge.f32.partialorder %v2169, 0.0
        %vm2183 = vcmp.ge.f32.partialorder %v2170, 0.0
        %vm2184 = vcmp.ge.f32.partialorder %v2171, 0.0
        %vm2185 = vcmp.ge.f32.partialorder %v2172, 0.0
        %vm2186 = vcmp.ge.f32.partialorder %v2173, 0.0
        %vm2187 = vcmp.ge.f32.partialorder %v2174, 0.0
        %vm2188 = vcmp.ge.f32.partialorder %v2175, 0.0
        %vm2189 = vcmp.ge.f32.partialorder %v2176, 0.0
        %vm2190 = vcmp.ge.f32.partialorder %v2177, 0.0
        %vm2191 = vcmp.ge.f32.partialorder %v2178, 0.0
        %vm2192 = vcmp.ge.f32.partialorder %v2179, 0.0
        %v2193 = vmul.f32 %v2167, 0.01
        %v2194 = vmul.f32 %v2168, 0.01
        %v2195 = vmul.f32 %v2169, 0.01
        %v2196 = vmul.f32 %v2170, 0.01
        %v2197 = vmul.f32 %v2171, 0.01
        %v2198 = vmul.f32 %v2172, 0.01
        %v2199 = vmul.f32 %v2173, 0.01
        %v2200 = vmul.f32 %v2174, 0.01
        %v2201 = vmul.f32 %v2175, 0.01
        %v2202 = vmul.f32 %v2176, 0.01
        %v2203 = vmul.f32 %v2177, 0.01
        %v2204 = vmul.f32 %v2178, 0.01
        %v2205 = vmul.f32 %v2179, 0.01
        %v2206 = vsel %vm2180, %v2167, %v2193
        %v2207 = vsel %vm2181, %v2168, %v2194
        %v2208 = vsel %vm2182, %v2169, %v2195
        %v2209 = vsel %vm2183, %v2170, %v2196
        %v2210 = vsel %vm2184, %v2171, %v2197
        %v2211 = vsel %vm2185, %v2172, %v2198
        %v2212 = vsel %vm2186, %v2173, %v2199
        %v2213 = vsel %vm2187, %v2174, %v2200
        %v2214 = vsel %vm2188, %v2175, %v2201
        %v2215 = vsel %vm2189, %v2176, %v2202
        %v2216 = vsel %vm2190, %v2177, %v2203
        %v2217 = vsel %vm2191, %v2178, %v2204
        %v2218 = vsel %vm2192, %v2179, %v2205
        %v2219 = vpack.c.bf16 %v2207, %v2206
        %v2220 = vpack.c.bf16 %v2209, %v2208
        %v2221 = vpack.c.bf16 %v2211, %v2210
        %v2222 = vpack.c.bf16 %v2213, %v2212
        %v2223 = vpack.c.bf16 %v2215, %v2214
        %v2224 = vpack.c.bf16 %v2217, %v2216
        %v2225 = vpack.c.bf16 %v2218, %v2218
        %v2226 = vld [vmem:[%s5] sm:$0xf]
        %v2227 = vld [vmem:[%s5 + $0x4] sm:$0xf]
        %v2228 = vld [vmem:[%s5 + $0x8] sm:$0xf]
        %v2229 = vld [vmem:[%s5 + $0xc] sm:$0xf]
        %v2230 = vld [vmem:[%s5 + $0x10] sm:$0xf]
        %v2231 = vld [vmem:[%s5 + $0x14] sm:$0xf]
        %v2232 = vld [vmem:[%s5 + $0x18] sm:$0xf]
        %v2233 = vld [vmem:[%s5 + $0x1c] sm:$0xf]
        %v2234 = vld [vmem:[%s7 + $0xc] sm:$0x1]
        %v2235 = vperm.slane %v2234, 0
        %v2244 = vunpack.c.l.b16 %v2226
        %v2245 = vunpack.c.l.b16 %v2227
        %v2246 = vunpack.c.l.b16 %v2228
        %v2247 = vunpack.c.l.b16 %v2229
        %v2248 = vunpack.c.l.b16 %v2230
        %v2249 = vunpack.c.l.b16 %v2231
        %v2250 = vunpack.c.l.b16 %v2232
        %v2251 = vunpack.c.l.b16 %v2233
        %v2252 = vpack.c.b16 %v2245, %v2244
        %v2253 = vpack.c.b16 %v2247, %v2246
        %v2254 = vpack.c.b16 %v2249, %v2248
        %v2255 = vpack.c.b16 %v2251, %v2250
        %v2261 = vsel %vm411, %v2219, 0
        %v2264 = vsel %vm411, %v2220, 0
        %v2267 = vsel %vm411, %v2221, 0
        %v2270 = vsel %vm411, %v2222, 0
        %v2273 = vsel %vm411, %v2223, 0
        %v2276 = vsel %vm411, %v2224, 0
        %v2279 = vsel %vm411, %v2225, 0
        %2281 = vmatpush.bf16.msra.mxu0 0
        %2282 = vmatpush.bf16.msra.mxu0 0
        %2283 = vmatpush.bf16.msra.mxu0 0
        %2284 = vmatpush.bf16.msra.mxu0 0
        %2285 = vmatpush.bf16.msra.mxu0 %v2255
        %2286 = vmatpush.bf16.msra.mxu0 %v2254
        %2287 = vmatpush.bf16.msra.mxu0 %v2253
        %2288 = vmatpush.bf16.msra.mxu0 %v2252
        %2289 = vmatmul.bf16.gmra.mxu0 %v2261
        %v2290 = vpop.f32.mrf.mxu0
        %v2291 = vadd.f32 %v2235, %v2290
        %v2292 = vpop.f32.mrf.mxu0
        %v2293 = vadd.f32 %v2235, %v2292
        %2294 = vmatmul.bf16.gmra.mxu0 %v2264
        %v2295 = vpop.f32.mrf.mxu0
        %v2296 = vadd.f32 %v2235, %v2295
        %v2297 = vpop.f32.mrf.mxu0
        %v2298 = vadd.f32 %v2235, %v2297
        %2299 = vmatmul.bf16.gmra.mxu0 %v2267
        %v2300 = vpop.f32.mrf.mxu0
        %v2301 = vadd.f32 %v2235, %v2300
        %v2302 = vpop.f32.mrf.mxu0
        %v2303 = vadd.f32 %v2235, %v2302
        %2304 = vmatmul.bf16.gmra.mxu0 %v2270
        %v2305 = vpop.f32.mrf.mxu0
        %v2306 = vadd.f32 %v2235, %v2305
        %v2307 = vpop.f32.mrf.mxu0
        %v2308 = vadd.f32 %v2235, %v2307
        %2309 = vmatmul.bf16.gmra.mxu0 %v2273
        %v2310 = vpop.f32.mrf.mxu0
        %v2311 = vadd.f32 %v2235, %v2310
        %v2312 = vpop.f32.mrf.mxu0
        %v2313 = vadd.f32 %v2235, %v2312
        %2314 = vmatmul.bf16.gmra.mxu0 %v2276
        %v2315 = vpop.f32.mrf.mxu0
        %v2316 = vadd.f32 %v2235, %v2315
        %v2317 = vpop.f32.mrf.mxu0
        %v2318 = vadd.f32 %v2235, %v2317
        %2319 = vmatmul.bf16.gmra.mxu0 %v2279
        %v2320 = vpop.f32.mrf.mxu0
        %v2321 = vadd.f32 %v2235, %v2320
        %v2322 = vpop.f32.mrf.mxu0
        %2323 = vdwg.mxu0
        %v2324 = vsel %vm346, %v2291, 0.0
        %2325 = vadd.xlane.f32.xlu0 %v2324
        %v2326 = vpop.xlane.xlu0 %2325
        %v2327 = vsel %vm346, %v2293, 0.0
        %2328 = vadd.xlane.f32.xlu0 %v2327
        %v2329 = vpop.xlane.xlu0 %2328
        %v2330 = vsel %vm346, %v2296, 0.0
        %2331 = vadd.xlane.f32.xlu0 %v2330
        %v2332 = vpop.xlane.xlu0 %2331
        %v2333 = vsel %vm346, %v2298, 0.0
        %2334 = vadd.xlane.f32.xlu0 %v2333
        %v2335 = vpop.xlane.xlu0 %2334
        %v2336 = vsel %vm346, %v2301, 0.0
        %2337 = vadd.xlane.f32.xlu0 %v2336
        %v2338 = vpop.xlane.xlu0 %2337
        %v2339 = vsel %vm346, %v2303, 0.0
        %2340 = vadd.xlane.f32.xlu0 %v2339
        %v2341 = vpop.xlane.xlu0 %2340
        %v2342 = vsel %vm346, %v2306, 0.0
        %2343 = vadd.xlane.f32.xlu0 %v2342
        %v2344 = vpop.xlane.xlu0 %2343
        %v2345 = vsel %vm346, %v2308, 0.0
        %2346 = vadd.xlane.f32.xlu0 %v2345
        %v2347 = vpop.xlane.xlu0 %2346
        %v2348 = vsel %vm346, %v2311, 0.0
        %2349 = vadd.xlane.f32.xlu0 %v2348
        %v2350 = vpop.xlane.xlu0 %2349
        %v2351 = vsel %vm346, %v2313, 0.0
        %2352 = vadd.xlane.f32.xlu0 %v2351
        %v2353 = vpop.xlane.xlu0 %2352
        %v2354 = vsel %vm346, %v2316, 0.0
        %2355 = vadd.xlane.f32.xlu0 %v2354
        %v2356 = vpop.xlane.xlu0 %2355
        %v2357 = vsel %vm346, %v2318, 0.0
        %2358 = vadd.xlane.f32.xlu0 %v2357
        %v2359 = vpop.xlane.xlu0 %2358
        %v2360 = vsel %vm346, %v2321, 0.0
        %2361 = vadd.xlane.f32.xlu0 %v2360
        %v2362 = vpop.xlane.xlu0 %2361
        %v2363 = vrcp.pop 32.0
        %v2364 = vmul.f32 32.0, %v2363
        %v2365 = vsub.f32 1.0, %v2364
        %v2366 = vmul.f32 %v2363, %v2365
        %v2367 = vadd.f32 %v2363, %v2366
        %vm2368 = vweird.f32 %v2363
        %v2369 = vsel %vm2368, %v2363, %v2367
        %v2370 = vmul.f32 %v2326, %v2369
        %v2371 = vmul.f32 %v2329, %v2369
        %v2372 = vmul.f32 %v2332, %v2369
        %v2373 = vmul.f32 %v2335, %v2369
        %v2374 = vmul.f32 %v2338, %v2369
        %v2375 = vmul.f32 %v2341, %v2369
        %v2376 = vmul.f32 %v2344, %v2369
        %v2377 = vmul.f32 %v2347, %v2369
        %v2378 = vmul.f32 %v2350, %v2369
        %v2379 = vmul.f32 %v2353, %v2369
        %v2380 = vmul.f32 %v2356, %v2369
        %v2381 = vmul.f32 %v2359, %v2369
        %v2382 = vmul.f32 %v2362, %v2369
        %v2383 = vsub.f32 %v2291, %v2370
        %v2384 = vsub.f32 %v2293, %v2371
        %v2385 = vsub.f32 %v2296, %v2372
        %v2386 = vsub.f32 %v2298, %v2373
        %v2387 = vsub.f32 %v2301, %v2374
        %v2388 = vsub.f32 %v2303, %v2375
        %v2389 = vsub.f32 %v2306, %v2376
        %v2390 = vsub.f32 %v2308, %v2377
        %v2391 = vsub.f32 %v2311, %v2378
        %v2392 = vsub.f32 %v2313, %v2379
        %v2393 = vsub.f32 %v2316, %v2380
        %v2394 = vsub.f32 %v2318, %v2381
        %v2395 = vsub.f32 %v2321, %v2382
        %v2396 = vmul.f32 %v2383, %v2383
        %v2397 = vmul.f32 %v2384, %v2384
        %v2398 = vmul.f32 %v2385, %v2385
        %v2399 = vmul.f32 %v2386, %v2386
        %v2400 = vmul.f32 %v2387, %v2387
        %v2401 = vmul.f32 %v2388, %v2388
        %v2402 = vmul.f32 %v2389, %v2389
        %v2403 = vmul.f32 %v2390, %v2390
        %v2404 = vmul.f32 %v2391, %v2391
        %v2405 = vmul.f32 %v2392, %v2392
        %v2406 = vmul.f32 %v2393, %v2393
        %v2407 = vmul.f32 %v2394, %v2394
        %v2408 = vmul.f32 %v2395, %v2395
        %v2409 = vsel %vm346, %v2396, 0.0
        %2410 = vadd.xlane.f32.xlu0 %v2409
        %v2411 = vpop.xlane.xlu0 %2410
        %v2412 = vsel %vm346, %v2397, 0.0
        %2413 = vadd.xlane.f32.xlu0 %v2412
        %v2414 = vpop.xlane.xlu0 %2413
        %v2415 = vsel %vm346, %v2398, 0.0
        %2416 = vadd.xlane.f32.xlu0 %v2415
        %v2417 = vpop.xlane.xlu0 %2416
        %v2418 = vsel %vm346, %v2399, 0.0
        %2419 = vadd.xlane.f32.xlu0 %v2418
        %v2420 = vpop.xlane.xlu0 %2419
        %v2421 = vsel %vm346, %v2400, 0.0
        %2422 = vadd.xlane.f32.xlu0 %v2421
        %v2423 = vpop.xlane.xlu0 %2422
        %v2424 = vsel %vm346, %v2401, 0.0
        %2425 = vadd.xlane.f32.xlu0 %v2424
        %v2426 = vpop.xlane.xlu0 %2425
        %v2427 = vsel %vm346, %v2402, 0.0
        %2428 = vadd.xlane.f32.xlu0 %v2427
        %v2429 = vpop.xlane.xlu0 %2428
        %v2430 = vsel %vm346, %v2403, 0.0
        %2431 = vadd.xlane.f32.xlu0 %v2430
        %v2432 = vpop.xlane.xlu0 %2431
        %v2433 = vsel %vm346, %v2404, 0.0
        %2434 = vadd.xlane.f32.xlu0 %v2433
        %v2435 = vpop.xlane.xlu0 %2434
        %v2436 = vsel %vm346, %v2405, 0.0
        %2437 = vadd.xlane.f32.xlu0 %v2436
        %v2438 = vpop.xlane.xlu0 %2437
        %v2439 = vsel %vm346, %v2406, 0.0
        %2440 = vadd.xlane.f32.xlu0 %v2439
        %v2441 = vpop.xlane.xlu0 %2440
        %v2442 = vsel %vm346, %v2407, 0.0
        %2443 = vadd.xlane.f32.xlu0 %v2442
        %v2444 = vpop.xlane.xlu0 %2443
        %v2445 = vsel %vm346, %v2408, 0.0
        %2446 = vadd.xlane.f32.xlu0 %v2445
        %v2447 = vpop.xlane.xlu0 %2446
        %v2448 = vmul.f32 %v2411, %v2369
        %v2449 = vmul.f32 %v2414, %v2369
        %v2450 = vmul.f32 %v2417, %v2369
        %v2451 = vmul.f32 %v2420, %v2369
        %v2452 = vmul.f32 %v2423, %v2369
        %v2453 = vmul.f32 %v2426, %v2369
        %v2454 = vmul.f32 %v2429, %v2369
        %v2455 = vmul.f32 %v2432, %v2369
        %v2456 = vmul.f32 %v2435, %v2369
        %v2457 = vmul.f32 %v2438, %v2369
        %v2458 = vmul.f32 %v2441, %v2369
        %v2459 = vmul.f32 %v2444, %v2369
        %v2460 = vmul.f32 %v2447, %v2369
        %v2461 = vadd.f32 %v2448, 1e-05
        %v2462 = vadd.f32 %v2449, 1e-05
        %v2463 = vadd.f32 %v2450, 1e-05
        %v2464 = vadd.f32 %v2451, 1e-05
        %v2465 = vadd.f32 %v2452, 1e-05
        %v2466 = vadd.f32 %v2453, 1e-05
        %v2467 = vadd.f32 %v2454, 1e-05
        %v2468 = vadd.f32 %v2455, 1e-05
        %v2469 = vadd.f32 %v2456, 1e-05
        %v2470 = vadd.f32 %v2457, 1e-05
        %v2471 = vadd.f32 %v2458, 1e-05
        %v2472 = vadd.f32 %v2459, 1e-05
        %v2473 = vadd.f32 %v2460, 1e-05
        %v2474 = vrsqrt.pop %v2461
        %v2475 = vmul.f32 %v2474, %v2461
        %v2476 = vmul.f32 %v2475, %v2474
        %v2477 = vmul.f32 0.5, %v2476
        %v2478 = vsub.f32 1.5, %v2477
        %v2479 = vmul.f32 %v2474, %v2478
        %vm2480 = vweird.f32 %v2461
        %vm2481 = vweird.f32 %v2474
        %vm2482 = vmor %vm2480, %vm2481
        %v2483 = vsel %vm2482, %v2474, %v2479
        %v2484 = vrsqrt.pop %v2462
        %v2485 = vmul.f32 %v2484, %v2462
        %v2486 = vmul.f32 %v2485, %v2484
        %v2487 = vmul.f32 0.5, %v2486
        %v2488 = vsub.f32 1.5, %v2487
        %v2489 = vmul.f32 %v2484, %v2488
        %vm2490 = vweird.f32 %v2462
        %vm2491 = vweird.f32 %v2484
        %vm2492 = vmor %vm2490, %vm2491
        %v2493 = vsel %vm2492, %v2484, %v2489
        %v2494 = vrsqrt.pop %v2463
        %v2495 = vmul.f32 %v2494, %v2463
        %v2496 = vmul.f32 %v2495, %v2494
        %v2497 = vmul.f32 0.5, %v2496
        %v2498 = vsub.f32 1.5, %v2497
        %v2499 = vmul.f32 %v2494, %v2498
        %vm2500 = vweird.f32 %v2463
        %vm2501 = vweird.f32 %v2494
        %vm2502 = vmor %vm2500, %vm2501
        %v2503 = vsel %vm2502, %v2494, %v2499
        %v2504 = vrsqrt.pop %v2464
        %v2505 = vmul.f32 %v2504, %v2464
        %v2506 = vmul.f32 %v2505, %v2504
        %v2507 = vmul.f32 0.5, %v2506
        %v2508 = vsub.f32 1.5, %v2507
        %v2509 = vmul.f32 %v2504, %v2508
        %vm2510 = vweird.f32 %v2464
        %vm2511 = vweird.f32 %v2504
        %vm2512 = vmor %vm2510, %vm2511
        %v2513 = vsel %vm2512, %v2504, %v2509
        %v2514 = vrsqrt.pop %v2465
        %v2515 = vmul.f32 %v2514, %v2465
        %v2516 = vmul.f32 %v2515, %v2514
        %v2517 = vmul.f32 0.5, %v2516
        %v2518 = vsub.f32 1.5, %v2517
        %v2519 = vmul.f32 %v2514, %v2518
        %vm2520 = vweird.f32 %v2465
        %vm2521 = vweird.f32 %v2514
        %vm2522 = vmor %vm2520, %vm2521
        %v2523 = vsel %vm2522, %v2514, %v2519
        %v2524 = vrsqrt.pop %v2466
        %v2525 = vmul.f32 %v2524, %v2466
        %v2526 = vmul.f32 %v2525, %v2524
        %v2527 = vmul.f32 0.5, %v2526
        %v2528 = vsub.f32 1.5, %v2527
        %v2529 = vmul.f32 %v2524, %v2528
        %vm2530 = vweird.f32 %v2466
        %vm2531 = vweird.f32 %v2524
        %vm2532 = vmor %vm2530, %vm2531
        %v2533 = vsel %vm2532, %v2524, %v2529
        %v2534 = vrsqrt.pop %v2467
        %v2535 = vmul.f32 %v2534, %v2467
        %v2536 = vmul.f32 %v2535, %v2534
        %v2537 = vmul.f32 0.5, %v2536
        %v2538 = vsub.f32 1.5, %v2537
        %v2539 = vmul.f32 %v2534, %v2538
        %vm2540 = vweird.f32 %v2467
        %vm2541 = vweird.f32 %v2534
        %vm2542 = vmor %vm2540, %vm2541
        %v2543 = vsel %vm2542, %v2534, %v2539
        %v2544 = vrsqrt.pop %v2468
        %v2545 = vmul.f32 %v2544, %v2468
        %v2546 = vmul.f32 %v2545, %v2544
        %v2547 = vmul.f32 0.5, %v2546
        %v2548 = vsub.f32 1.5, %v2547
        %v2549 = vmul.f32 %v2544, %v2548
        %vm2550 = vweird.f32 %v2468
        %vm2551 = vweird.f32 %v2544
        %vm2552 = vmor %vm2550, %vm2551
        %v2553 = vsel %vm2552, %v2544, %v2549
        %v2554 = vrsqrt.pop %v2469
        %v2555 = vmul.f32 %v2554, %v2469
        %v2556 = vmul.f32 %v2555, %v2554
        %v2557 = vmul.f32 0.5, %v2556
        %v2558 = vsub.f32 1.5, %v2557
        %v2559 = vmul.f32 %v2554, %v2558
        %vm2560 = vweird.f32 %v2469
        %vm2561 = vweird.f32 %v2554
        %vm2562 = vmor %vm2560, %vm2561
        %v2563 = vsel %vm2562, %v2554, %v2559
        %v2564 = vrsqrt.pop %v2470
        %v2565 = vmul.f32 %v2564, %v2470
        %v2566 = vmul.f32 %v2565, %v2564
        %v2567 = vmul.f32 0.5, %v2566
        %v2568 = vsub.f32 1.5, %v2567
        %v2569 = vmul.f32 %v2564, %v2568
        %vm2570 = vweird.f32 %v2470
        %vm2571 = vweird.f32 %v2564
        %vm2572 = vmor %vm2570, %vm2571
        %v2573 = vsel %vm2572, %v2564, %v2569
        %v2574 = vrsqrt.pop %v2471
        %v2575 = vmul.f32 %v2574, %v2471
        %v2576 = vmul.f32 %v2575, %v2574
        %v2577 = vmul.f32 0.5, %v2576
        %v2578 = vsub.f32 1.5, %v2577
        %v2579 = vmul.f32 %v2574, %v2578
        %vm2580 = vweird.f32 %v2471
        %vm2581 = vweird.f32 %v2574
        %vm2582 = vmor %vm2580, %vm2581
        %v2583 = vsel %vm2582, %v2574, %v2579
        %v2584 = vrsqrt.pop %v2472
        %v2585 = vmul.f32 %v2584, %v2472
        %v2586 = vmul.f32 %v2585, %v2584
        %v2587 = vmul.f32 0.5, %v2586
        %v2588 = vsub.f32 1.5, %v2587
        %v2589 = vmul.f32 %v2584, %v2588
        %vm2590 = vweird.f32 %v2472
        %vm2591 = vweird.f32 %v2584
        %vm2592 = vmor %vm2590, %vm2591
        %v2593 = vsel %vm2592, %v2584, %v2589
        %v2594 = vrsqrt.pop %v2473
        %v2595 = vmul.f32 %v2594, %v2473
        %v2596 = vmul.f32 %v2595, %v2594
        %v2597 = vmul.f32 0.5, %v2596
        %v2598 = vsub.f32 1.5, %v2597
        %v2599 = vmul.f32 %v2594, %v2598
        %vm2600 = vweird.f32 %v2473
        %vm2601 = vweird.f32 %v2594
        %vm2602 = vmor %vm2600, %vm2601
        %v2603 = vsel %vm2602, %v2594, %v2599
        %v2604 = vmul.f32 %v2383, %v2483
        %v2605 = vmul.f32 %v2384, %v2493
        %v2606 = vmul.f32 %v2385, %v2503
        %v2607 = vmul.f32 %v2386, %v2513
        %v2608 = vmul.f32 %v2387, %v2523
        %v2609 = vmul.f32 %v2388, %v2533
        %v2610 = vmul.f32 %v2389, %v2543
        %v2611 = vmul.f32 %v2390, %v2553
        %v2612 = vmul.f32 %v2391, %v2563
        %v2613 = vmul.f32 %v2392, %v2573
        %v2614 = vmul.f32 %v2393, %v2583
        %v2615 = vmul.f32 %v2394, %v2593
        %v2616 = vmul.f32 %v2395, %v2603
        %v2617 = vld [vmem:[%s7 + $0xd] sm:$0x1]
        %v2618 = vperm.slane %v2617, 0
        %v2619 = vmul.f32 %v2604, %v2618
        %v2620 = vmul.f32 %v2605, %v2618
        %v2621 = vmul.f32 %v2606, %v2618
        %v2622 = vmul.f32 %v2607, %v2618
        %v2623 = vmul.f32 %v2608, %v2618
        %v2624 = vmul.f32 %v2609, %v2618
        %v2625 = vmul.f32 %v2610, %v2618
        %v2626 = vmul.f32 %v2611, %v2618
        %v2627 = vmul.f32 %v2612, %v2618
        %v2628 = vmul.f32 %v2613, %v2618
        %v2629 = vmul.f32 %v2614, %v2618
        %v2630 = vmul.f32 %v2615, %v2618
        %v2631 = vmul.f32 %v2616, %v2618
        %v2632 = vld [vmem:[%s7 + $0xe] sm:$0x1]
        %v2633 = vperm.slane %v2632, 0
        %v2634 = vadd.f32 %v2619, %v2633
        %v2635 = vadd.f32 %v2620, %v2633
        %v2636 = vadd.f32 %v2621, %v2633
        %v2637 = vadd.f32 %v2622, %v2633
        %v2638 = vadd.f32 %v2623, %v2633
        %v2639 = vadd.f32 %v2624, %v2633
        %v2640 = vadd.f32 %v2625, %v2633
        %v2641 = vadd.f32 %v2626, %v2633
        %v2642 = vadd.f32 %v2627, %v2633
        %v2643 = vadd.f32 %v2628, %v2633
        %v2644 = vadd.f32 %v2629, %v2633
        %v2645 = vadd.f32 %v2630, %v2633
        %v2646 = vadd.f32 %v2631, %v2633
        %vm2647 = vcmp.ge.f32.partialorder %v2634, 0.0
        %vm2648 = vcmp.ge.f32.partialorder %v2635, 0.0
        %vm2649 = vcmp.ge.f32.partialorder %v2636, 0.0
        %vm2650 = vcmp.ge.f32.partialorder %v2637, 0.0
        %vm2651 = vcmp.ge.f32.partialorder %v2638, 0.0
        %vm2652 = vcmp.ge.f32.partialorder %v2639, 0.0
        %vm2653 = vcmp.ge.f32.partialorder %v2640, 0.0
        %vm2654 = vcmp.ge.f32.partialorder %v2641, 0.0
        %vm2655 = vcmp.ge.f32.partialorder %v2642, 0.0
        %vm2656 = vcmp.ge.f32.partialorder %v2643, 0.0
        %vm2657 = vcmp.ge.f32.partialorder %v2644, 0.0
        %vm2658 = vcmp.ge.f32.partialorder %v2645, 0.0
        %vm2659 = vcmp.ge.f32.partialorder %v2646, 0.0
        %v2660 = vmul.f32 %v2634, 0.01
        %v2661 = vmul.f32 %v2635, 0.01
        %v2662 = vmul.f32 %v2636, 0.01
        %v2663 = vmul.f32 %v2637, 0.01
        %v2664 = vmul.f32 %v2638, 0.01
        %v2665 = vmul.f32 %v2639, 0.01
        %v2666 = vmul.f32 %v2640, 0.01
        %v2667 = vmul.f32 %v2641, 0.01
        %v2668 = vmul.f32 %v2642, 0.01
        %v2669 = vmul.f32 %v2643, 0.01
        %v2670 = vmul.f32 %v2644, 0.01
        %v2671 = vmul.f32 %v2645, 0.01
        %v2672 = vmul.f32 %v2646, 0.01
        %v2673 = vsel %vm2647, %v2634, %v2660
        %v2674 = vsel %vm2648, %v2635, %v2661
        %v2675 = vsel %vm2649, %v2636, %v2662
        %v2676 = vsel %vm2650, %v2637, %v2663
        %v2677 = vsel %vm2651, %v2638, %v2664
        %v2678 = vsel %vm2652, %v2639, %v2665
        %v2679 = vsel %vm2653, %v2640, %v2666
        %v2680 = vsel %vm2654, %v2641, %v2667
        %v2681 = vsel %vm2655, %v2642, %v2668
        %v2682 = vsel %vm2656, %v2643, %v2669
        %v2683 = vsel %vm2657, %v2644, %v2670
        %v2684 = vsel %vm2658, %v2645, %v2671
        %v2685 = vsel %vm2659, %v2646, %v2672
        %v2686 = vpack.c.bf16 %v2674, %v2673
        %v2687 = vpack.c.bf16 %v2676, %v2675
        %v2688 = vpack.c.bf16 %v2678, %v2677
        %v2689 = vpack.c.bf16 %v2680, %v2679
        %v2690 = vpack.c.bf16 %v2682, %v2681
        %v2691 = vpack.c.bf16 %v2684, %v2683
        %v2692 = vpack.c.bf16 %v2685, %v2685
        %v2693 = vld [vmem:[%s6] sm:$0xf]
        %v2694 = vld [vmem:[%s6 + $0x4] sm:$0xf]
        %v2695 = vld [vmem:[%s6 + $0x8] sm:$0xf]
        %v2696 = vld [vmem:[%s6 + $0xc] sm:$0xf]
        %v2697 = vld [vmem:[%s7 + $0xf] sm:$0x1]
        %v2698 = vperm.slane %v2697, 0
        %v2703 = vunpack.c.l.b16 %v2693
        %v2704 = vunpack.c.l.b16 %v2694
        %v2705 = vunpack.c.l.b16 %v2695
        %v2706 = vunpack.c.l.b16 %v2696
        %v2707 = vpack.c.b16 %v2704, %v2703
        %v2708 = vpack.c.b16 %v2706, %v2705
        %v2712 = vsel %vm346, %v2686, 0
        %v2715 = vsel %vm346, %v2687, 0
        %v2718 = vsel %vm346, %v2688, 0
        %v2721 = vsel %vm346, %v2689, 0
        %v2724 = vsel %vm346, %v2690, 0
        %v2727 = vsel %vm346, %v2691, 0
        %v2730 = vsel %vm346, %v2692, 0
        %2732 = vmatpush.bf16.msra.mxu0 0
        %2733 = vmatpush.bf16.msra.mxu0 0
        %2734 = vmatpush.bf16.msra.mxu0 0
        %2735 = vmatpush.bf16.msra.mxu0 0
        %2736 = vmatpush.bf16.msra.mxu0 0
        %2737 = vmatpush.bf16.msra.mxu0 0
        %2738 = vmatpush.bf16.msra.mxu0 %v2708
        %2739 = vmatpush.bf16.msra.mxu0 %v2707
        %2740 = vmatmul.bf16.gmra.mxu0 %v2712
        %v2741 = vpop.f32.mrf.mxu0
        %v2742 = vadd.f32 %v2698, %v2741
        %v2743 = vpop.f32.mrf.mxu0
        %v2744 = vadd.f32 %v2698, %v2743
        %2745 = vmatmul.bf16.gmra.mxu0 %v2715
        %v2746 = vpop.f32.mrf.mxu0
        %v2747 = vadd.f32 %v2698, %v2746
        %v2748 = vpop.f32.mrf.mxu0
        %v2749 = vadd.f32 %v2698, %v2748
        %2750 = vmatmul.bf16.gmra.mxu0 %v2718
        %v2751 = vpop.f32.mrf.mxu0
        %v2752 = vadd.f32 %v2698, %v2751
        %v2753 = vpop.f32.mrf.mxu0
        %v2754 = vadd.f32 %v2698, %v2753
        %2755 = vmatmul.bf16.gmra.mxu0 %v2721
        %v2756 = vpop.f32.mrf.mxu0
        %v2757 = vadd.f32 %v2698, %v2756
        %v2758 = vpop.f32.mrf.mxu0
        %v2759 = vadd.f32 %v2698, %v2758
        %2760 = vmatmul.bf16.gmra.mxu0 %v2724
        %v2761 = vpop.f32.mrf.mxu0
        %v2762 = vadd.f32 %v2698, %v2761
        %v2763 = vpop.f32.mrf.mxu0
        %v2764 = vadd.f32 %v2698, %v2763
        %2765 = vmatmul.bf16.gmra.mxu0 %v2727
        %v2766 = vpop.f32.mrf.mxu0
        %v2767 = vadd.f32 %v2698, %v2766
        %v2768 = vpop.f32.mrf.mxu0
        %v2769 = vadd.f32 %v2698, %v2768
        %2770 = vmatmul.bf16.gmra.mxu0 %v2730
        %v2771 = vpop.f32.mrf.mxu0
        %v2772 = vadd.f32 %v2698, %v2771
        %v2773 = vpop.f32.mrf.mxu0
        %2774 = vdwg.mxu0
        %2775 = vst [vmem:[%s299] sm:$0xff] %v2742
        %2776 = vst [vmem:[%s299 + $0x8] sm:$0xff] %v2744
        %2777 = vst [vmem:[%s299 + $0x10] sm:$0xff] %v2747
        %2778 = vst [vmem:[%s299 + $0x18] sm:$0xff] %v2749
        %2779 = vst [vmem:[%s299 + $0x20] sm:$0xff] %v2752
        %2780 = vst [vmem:[%s299 + $0x28] sm:$0xff] %v2754
        %2781 = vst [vmem:[%s299 + $0x30] sm:$0xff] %v2757
        %2782 = vst [vmem:[%s299 + $0x38] sm:$0xff] %v2759
        %2783 = vst [vmem:[%s299 + $0x40] sm:$0xff] %v2762
        %2784 = vst [vmem:[%s299 + $0x48] sm:$0xff] %v2764
        %2785 = vst [vmem:[%s299 + $0x50] sm:$0xff] %v2767
        %2786 = vst [vmem:[%s299 + $0x58] sm:$0xff] %v2769
        %2787 = vst [vmem:[%s299 + $0x60] sm:$0xff] %v2772
        %s2788 = sand.u32 %s203, 1
        %s2789 = scalar_lea.sflag [#allocation3], %s2788
        %s2790 = sand.u32 %s203, 1
        %s2791 = smul.addr %s2790, 104
        %s2792 = scalar_lea.vmem [#allocation2], %s2791
        // Predicated region
        $region53: #{tpu_custom_call.1} parent=51 // pred_check
          %p2793 = pneg %p213
        $region54: #{tpu_custom_call.1} parent=51 // pred_check_branch
          %2795 = sbr.rel (%p2793) target = $region56
        $region55: #{tpu_custom_call.1} parent=51 // pred_region
          %s2796 = smul.u32 13, %s22
          %2798 = vsyncadd %s2789, 0
          %s2799 = smul.addr %s2796, 8
          %s2800 = scalar_lea.hbm %s8, %s2799
          %s2801 = sshll.u32 %s2792, 4
          %s2802 = int_to_ptr.vmem [resolvable:$true] %s2801
          %s2803 = sshll.u32 %s2800, 4
          %s2804 = int_to_ptr.hbm [resolvable:$true] %s2803
          %2809 = dma.vmem_to_hbm [thread:$0]  %s2802, 1664, %s2804, %s2789, 128, 128, 8
        $region56: #{tpu_custom_call.1} parent=51 // pred_fallthru
          _
      $region52: #{tpu_custom_call.1} parent=5 // pred_fallthru
        _
      %p2810 = scmp.le.s32.totalorder 2, %s17
      // Predicated region
      $region57: #{tpu_custom_call.1} parent=5 // pred_check
        %p2811 = pneg %p2810
      $region58: #{tpu_custom_call.1} parent=5 // pred_check_branch
        %2813 = sbr.rel (%p2811) target = $region60
      $region59: #{tpu_custom_call.1} parent=5 // pred_region
        %s2814 = ssub.s32 %s17, 2
        // Predicated region
        $region61: #{tpu_custom_call.1} parent=59 // pred_check
          %p2815 = pneg %p219
        $region62: #{tpu_custom_call.1} parent=59 // pred_check_branch
          %2817 = sbr.rel (%p2815) target = $region64
        $region63: #{tpu_custom_call.1} parent=59 // pred_region
          %s2818 = sand.u32 %s204, 1
          %s2819 = scalar_lea.sflag [#allocation3], %s2818
          %s2820 = sand.u32 %s204, 1
          %s2821 = smul.addr %s2820, 104
          %s2822 = scalar_lea.vmem [#allocation2], %s2821
          %2824 = dma.done %s2819, 1664
        $region64: #{tpu_custom_call.1} parent=59 // pred_fallthru
          _
      $region60: #{tpu_custom_call.1} parent=5 // pred_fallthru
        _
    $region6: #{tpu_custom_call.1} parent=1 // loop_footer
      %s21 = sadd.s32 1, %s17
    $region7: #{tpu_custom_call.1} parent=1 // loop_footer_branch
      %16 = sbr.rel target = $region3
    $region8: #{tpu_custom_call.1} parent=1 // loop_exit
      _
    %2825 = vsyncpa [#allocation3], 1
    %s2826 = scalar_lea.sflag [#allocation3], 1
    %2827 = vsyncpa %s2826, 1

</llo_original>
